<compile_context>
chip_gen: v7x
topology: tpu7x:2x2x1
jax: 0.10.0
libtpu: 0.0.40
codegen_flags: <defaults>
</compile_context>

<pallas_src>
import functools

import jax
import jax.numpy as jnp
from jax.experimental import pallas as pl
from jax.experimental.pallas import tpu as pltpu

_EPS = 1e-5


# ---------------------------------------------------------------------------
# wrapper-side layout glue (pure data movement, ~1x input bytes)
# ---------------------------------------------------------------------------
def _space_to_depth_pad(x_nhwc, s, Ho, Wo):
    """Zero-pad spatially by 1 and split the stride-s phases into a leading axis.

    Returns Xs of shape (N, s*s, Hs, Ws, Cin) with
        Xs[n, ry*s + rx, a, b, c] == x_pad[n, a*s + ry, b*s + rx, c]
    so conv tap (dy, dx) of the stride-s 3x3 conv is the STATIC slice
        Xs[n, (dy % s)*s + dx % s, dy//s : dy//s + Ho, dx//s : dx//s + Wo, :].
    """
    N, H, W, Cin = x_nhwc.shape
    Hs = -(-(H + 2) // s)
    Ws = -(-(W + 2) // s)
    assert Hs >= Ho + 2 // s and Ws >= Wo + 2 // s
    ph = s * Hs - (H + 2)           # extra (never-read) rows/cols so dims divide by s
    pw = s * Ws - (W + 2)
    xp = jnp.pad(x_nhwc, ((0, 0), (1, 1 + ph), (1, 1 + pw), (0, 0)))
    xp = xp.reshape(N, Hs, s, Ws, s, Cin)
    xp = jnp.transpose(xp, (0, 2, 4, 1, 3, 5))
    return xp.reshape(N, s * s, Hs, Ws, Cin)


def _vmem_limit_bytes():
    """Generation-aware VMEM hint: ~3/4 of physical (64 MiB v7x / 128 MiB v5e-v6e)."""
    try:
        cap = getattr(pltpu.get_tpu_info(), "vmem_capacity_bytes", None) or (64 << 20)
    except Exception:
        cap = 64 << 20
    return int(min(cap * 3 // 4, 100 << 20))


def _pick_batch_tile(N, s, Ho, Wo, Hs, Ws, Cin, P, vmem_limit):
    """Largest divisor of N whose rough per-step VMEM footprint fits the budget."""
    ss = s * s
    st1 = (2 * ss * Hs * Ws * Cin * 2          # xs block (double-buffered)
           + 4 * Ho * Wo * P * 2               # acc1 (+ sc_pre) bf16 outputs (x2)
           + 3 * Ho * Wo * Cin * 2             # packed-row temporary
           + 2 * Ho * Wo * P * 4)              # f32 accumulator + squares
    st2 = (2 * Ho * Wo * P * 2                 # acc1 in (x2)
           + (Ho + 2) * (Wo + 2) * P * 2       # padded scratch
           + 2 * Ho * Wo * P * 2               # acc2 out (x2)
           + 3 * Ho * Wo * P * 2               # packed-row temporary
           + 2 * Ho * Wo * P * 4)              # f32 accumulator + squares
    per_img = max(st1, st2)
    budget = int(vmem_limit * 0.6)
    best = 1
    for b in range(1, N + 1):
        if N % b == 0 and b * per_img <= budget:
            best = b
    return best


def _fold_bn(ssum, sqsum, gamma, beta, m):
    """PyTorch train-mode BN over (N,H,W) folded into one (scale, bias) pair, f32."""
    mean = ssum / m
    var = jnp.maximum(sqsum / m - mean * mean, 0.0)     # one-pass; clamp cancellation
    scale = gamma.reshape(1, -1).astype(jnp.float32) * jax.lax.rsqrt(var + _EPS)
    bias = beta.reshape(1, -1).astype(jnp.float32) - mean * scale
    return jnp.concatenate([scale, bias], axis=0)       # (2, P) f32


# ---------------------------------------------------------------------------
# kernels
# ---------------------------------------------------------------------------
def _stage1_kernel_sc(xs_ref, w1_ref, wsc_ref,
                      acc1_ref, scpre_ref, s1_ref, q1_ref, ssc_ref, qsc_ref,
                      *, s, Ho, Wo, Cin):
    B = acc1_ref.shape[0]
    P = acc1_ref.shape[-1]
    M = B * Ho * Wo

    def tap(dy, dx):
        return xs_ref[:, (dy % s) * s + (dx % s),
                      dy // s:dy // s + Ho, dx // s:dx // s + Wo, :]

    # conv1: one accumulating MXU matmul per kernel row (K = 3*Cin).
    acc = None
    for dy in range(3):
        row = jnp.concatenate([tap(dy, 0), tap(dy, 1), tap(dy, 2)], axis=-1)
        part = jnp.dot(row.reshape(M, 3 * Cin), w1_ref[dy],
                       preferred_element_type=jnp.float32)
        acc = part if acc is None else acc + part

    # 1x1 conv shortcut: the center tap IS x[:, ::s, ::s, :] -> no extra HBM input.
    ctr = tap(1, 1).reshape(M, Cin)
    sc = jnp.dot(ctr, wsc_ref[...], preferred_element_type=jnp.float32)

    acc1_ref[...] = acc.reshape(B, Ho, Wo, P).astype(acc1_ref.dtype)
    scpre_ref[...] = sc.reshape(B, Ho, Wo, P).astype(scpre_ref.dtype)

    # per-tile BN statistic partials (f32, taken before the bf16 down-cast).
    s1_ref[...] = jnp.sum(acc, axis=0, keepdims=True)
    q1_ref[...] = jnp.sum(acc * acc, axis=0, keepdims=True)
    ssc_ref[...] = jnp.sum(sc, axis=0, keepdims=True)
    qsc_ref[...] = jnp.sum(sc * sc, axis=0, keepdims=True)


def _stage1_kernel_id(xs_ref, w1_ref, acc1_ref, s1_ref, q1_ref, *, s, Ho, Wo, Cin):
    B = acc1_ref.shape[0]
    P = acc1_ref.shape[-1]
    M = B * Ho * Wo

    def tap(dy, dx):
        return xs_ref[:, (dy % s) * s + (dx % s),
                      dy // s:dy // s + Ho, dx // s:dx // s + Wo, :]

    acc = None
    for dy in range(3):
        row = jnp.concatenate([tap(dy, 0), tap(dy, 1), tap(dy, 2)], axis=-1)
        part = jnp.dot(row.reshape(M, 3 * Cin), w1_ref[dy],
                       preferred_element_type=jnp.float32)
        acc = part if acc is None else acc + part

    acc1_ref[...] = acc.reshape(B, Ho, Wo, P).astype(acc1_ref.dtype)
    s1_ref[...] = jnp.sum(acc, axis=0, keepdims=True)
    q1_ref[...] = jnp.sum(acc * acc, axis=0, keepdims=True)


def _stage2_kernel(acc1_ref, sb1_ref, w2_ref, acc2_ref, s2_ref, q2_ref, pad_ref,
                   *, Ho, Wo, P):
    B = acc1_ref.shape[0]
    M = B * Ho * Wo

    # BN1 with pre-folded scale/bias (global batch stats) + ReLU, bf16 for the MXU.
    sb1 = sb1_ref[...]
    scale = sb1[0:1, :].reshape(1, 1, 1, P)
    bias = sb1[1:2, :].reshape(1, 1, 1, P)
    h1 = jnp.maximum(acc1_ref[...].astype(jnp.float32) * scale + bias, 0.0)
    h1 = h1.astype(jnp.bfloat16)

    # persistent zero-bordered scratch: zero only the 1-wide border, store the interior.
    pad_ref[:, 0:1, :, :] = jnp.zeros((B, 1, Wo + 2, P), jnp.bfloat16)
    pad_ref[:, Ho + 1:Ho + 2, :, :] = jnp.zeros((B, 1, Wo + 2, P), jnp.bfloat16)
    pad_ref[:, :, 0:1, :] = jnp.zeros((B, Ho + 2, 1, P), jnp.bfloat16)
    pad_ref[:, :, Wo + 1:Wo + 2, :] = jnp.zeros((B, Ho + 2, 1, P), jnp.bfloat16)
    pad_ref[:, 1:1 + Ho, 1:1 + Wo, :] = h1

    # conv2: one accumulating MXU matmul per kernel row (K = 3*P).
    acc = None
    for dy in range(3):
        row = jnp.concatenate(
            [pad_ref[:, dy:dy + Ho, dx:dx + Wo, :] for dx in range(3)], axis=-1)
        part = jnp.dot(row.reshape(M, 3 * P), w2_ref[dy],
                       preferred_element_type=jnp.float32)
        acc = part if acc is None else acc + part

    acc2_ref[...] = acc.reshape(B, Ho, Wo, P).astype(acc2_ref.dtype)
    s2_ref[...] = jnp.sum(acc, axis=0, keepdims=True)
    q2_ref[...] = jnp.sum(acc * acc, axis=0, keepdims=True)


def _stage3_kernel_sc(acc2_ref, scpre_ref, sb2_ref, sbsc_ref, out_ref):
    P = out_ref.shape[-1]
    sb2 = sb2_ref[...]
    sbsc = sbsc_ref[...]
    h2 = (acc2_ref[...].astype(jnp.float32) * sb2[0:1, :].reshape(1, 1, 1, P)
          + sb2[1:2, :].reshape(1, 1, 1, P))
    sc = (scpre_ref[...].astype(jnp.float32) * sbsc[0:1, :].reshape(1, 1, 1, P)
          + sbsc[1:2, :].reshape(1, 1, 1, P))
    out_ref[...] = jnp.maximum(h2 + sc, 0.0).astype(out_ref.dtype)


def _stage3_kernel_id(acc2_ref, xs_ref, sb2_ref, out_ref, *, Ho, Wo):
    P = out_ref.shape[-1]
    sb2 = sb2_ref[...]
    h2 = (acc2_ref[...].astype(jnp.float32) * sb2[0:1, :].reshape(1, 1, 1, P)
          + sb2[1:2, :].reshape(1, 1, 1, P))
    # identity shortcut: center tap of the padded input (stride 1, Cin == P).
    sc = xs_ref[:, 0, 1:1 + Ho, 1:1 + Wo, :].astype(jnp.float32)
    out_ref[...] = jnp.maximum(h2 + sc, 0.0).astype(out_ref.dtype)


# ---------------------------------------------------------------------------
# NHWC-native forward (call this when chaining blocks)
# ---------------------------------------------------------------------------
def basic_block_forward_nhwc(x_nhwc, params, stride):
    x = jnp.asarray(x_nhwc, jnp.float32)
    N, H, W, Cin = x.shape
    P = params["w1"].shape[0]
    s = int(stride)
    Ho = (H - 1) // s + 1           # == (H + 2 - 3)//s + 1
    Wo = (W - 1) // s + 1
    has_sc = (s != 1) or (Cin != P)
    M_tot = N * Ho * Wo

    xs = _space_to_depth_pad(x, s, Ho, Wo).astype(jnp.bfloat16)
    _, SS, Hs, Ws, _ = xs.shape

    vmem_limit = _vmem_limit_bytes()
    Bt = _pick_batch_tile(N, s, Ho, Wo, Hs, Ws, Cin, P, vmem_limit)
    G = N // Bt

    # PyTorch OIHW conv weights -> per-kernel-row (3, 3*C, Cout) matmul layout, bf16.
    w1m = jnp.transpose(params["w1"], (2, 3, 1, 0)).reshape(3, 3 * Cin, P).astype(jnp.bfloat16)
    w2m = jnp.transpose(params["w2"], (2, 3, 1, 0)).reshape(3, 3 * P, P).astype(jnp.bfloat16)

    img_bf16 = jax.ShapeDtypeStruct((N, Ho, Wo, P), jnp.bfloat16)
    stat_f32 = jax.ShapeDtypeStruct((G, 1, P), jnp.float32)
    out_f32 = jax.ShapeDtypeStruct((N, Ho, Wo, P), jnp.float32)

    img_spec = pl.BlockSpec((Bt, Ho, Wo, P), lambda n: (n, 0, 0, 0))
    stat_spec = pl.BlockSpec((None, 1, P), lambda n: (n, 0, 0))
    xs_spec = pl.BlockSpec((Bt, SS, Hs, Ws, Cin), lambda n: (n, 0, 0, 0, 0))
    w1_spec = pl.BlockSpec((3, 3 * Cin, P), lambda n: (0, 0, 0))
    w2_spec = pl.BlockSpec((3, 3 * P, P), lambda n: (0, 0, 0))
    vec2_spec = pl.BlockSpec((2, P), lambda n: (0, 0))

    cparams = pltpu.CompilerParams(dimension_semantics=("parallel",),
                                   vmem_limit_bytes=vmem_limit)

    # ---- stage 1: conv1 (+ 1x1 shortcut conv) + BN statistic partials ---------------
    if has_sc:
        wscm = jnp.transpose(params["wsc"][:, :, 0, 0], (1, 0)).astype(jnp.bfloat16)
        ce1 = pl.CostEstimate(
            flops=2 * M_tot * (9 * Cin + Cin) * P + 8 * M_tot * P,
            transcendentals=0,
            bytes_accessed=xs.size * 2 + (w1m.size + wscm.size) * 2 + 2 * M_tot * P * 2)
        acc1, sc_pre, s1p, q1p, sscp, qscp = pl.pallas_call(
            functools.partial(_stage1_kernel_sc, s=s, Ho=Ho, Wo=Wo, Cin=Cin),
            grid=(G,),
            in_specs=[xs_spec, w1_spec, pl.BlockSpec((Cin, P), lambda n: (0, 0))],
            out_specs=[img_spec, img_spec, stat_spec, stat_spec, stat_spec, stat_spec],
            out_shape=[img_bf16, img_bf16, stat_f32, stat_f32, stat_f32, stat_f32],
            compiler_params=cparams,
            cost_estimate=ce1,
        )(xs, w1m, wscm)
    else:
        ce1 = pl.CostEstimate(
            flops=2 * M_tot * 9 * Cin * P + 4 * M_tot * P,
            transcendentals=0,
            bytes_accessed=xs.size * 2 + w1m.size * 2 + M_tot * P * 2)
        acc1, s1p, q1p = pl.pallas_call(
            functools.partial(_stage1_kernel_id, s=s, Ho=Ho, Wo=Wo, Cin=Cin),
            grid=(G,),
            in_specs=[xs_spec, w1_spec],
            out_specs=[img_spec, stat_spec, stat_spec],
            out_shape=[img_bf16, stat_f32, stat_f32],
            compiler_params=cparams,
            cost_estimate=ce1,
        )(xs, w1m)

    sb1 = _fold_bn(jnp.sum(s1p, axis=0), jnp.sum(q1p, axis=0),
                   params["g1"], params["b1"], M_tot)

    # ---- stage 2: BN1 + ReLU + conv2 + BN2 statistic partials ------------------------
    ce2 = pl.CostEstimate(
        flops=2 * M_tot * 9 * P * P + 12 * M_tot * P,
        transcendentals=0,
        bytes_accessed=2 * M_tot * P * 2 + w2m.size * 2)
    acc2, s2p, q2p = pl.pallas_call(
        functools.partial(_stage2_kernel, Ho=Ho, Wo=Wo, P=P),
        grid=(G,),
        in_specs=[img_spec, vec2_spec, w2_spec],
        out_specs=[img_spec, stat_spec, stat_spec],
        out_shape=[img_bf16, stat_f32, stat_f32],
        scratch_shapes=[pltpu.VMEM((Bt, Ho + 2, Wo + 2, P), jnp.bfloat16)],
        compiler_params=cparams,
        cost_estimate=ce2,
    )(acc1, sb1, w2m)

    sb2 = _fold_bn(jnp.sum(s2p, axis=0), jnp.sum(q2p, axis=0),
                   params["g2"], params["b2"], M_tot)

    # ---- stage 3: BN2 + shortcut (BN'd conv or raw identity) + add + ReLU ------------
    if has_sc:
        sbsc = _fold_bn(jnp.sum(sscp, axis=0), jnp.sum(qscp, axis=0),
                        params["gsc"], params["bsc"], M_tot)
        ce3 = pl.CostEstimate(flops=8 * M_tot * P, transcendentals=0,
                              bytes_accessed=2 * M_tot * P * 2 + M_tot * P * 4)
        out_nhwc = pl.pallas_call(
            _stage3_kernel_sc,
            grid=(G,),
            in_specs=[img_spec, img_spec, vec2_spec, vec2_spec],
            out_specs=img_spec,
            out_shape=out_f32,
            compiler_params=cparams,
            cost_estimate=ce3,
        )(acc2, sc_pre, sb2, sbsc)
    else:
        ce3 = pl.CostEstimate(flops=6 * M_tot * P, transcendentals=0,
                              bytes_accessed=M_tot * P * 2 + xs.size * 2 + M_tot * P * 4)
        out_nhwc = pl.pallas_call(
            functools.partial(_stage3_kernel_id, Ho=Ho, Wo=Wo),
            grid=(G,),
            in_specs=[img_spec, xs_spec, vec2_spec],
            out_specs=img_spec,
            out_shape=out_f32,
            compiler_params=cparams,
            cost_estimate=ce3,
        )(acc2, xs, sb2)

    return out_nhwc


# PyTorch-style NCHW boundary adapter (transpose only at the network boundary).
def basic_block_forward(x_nchw, params, stride):
    x_nhwc = jnp.transpose(jnp.asarray(x_nchw, jnp.float32), (0, 2, 3, 1))
    out_nhwc = basic_block_forward_nhwc(x_nhwc, params, stride)
    return jnp.transpose(out_nhwc, (0, 3, 1, 2))


# ---------------------------------------------------------------------------
# pure-JAX reference (lax.conv) with identical train-mode BN math
# ---------------------------------------------------------------------------
def basic_block_reference(x_nchw, params, stride):
    x = jnp.transpose(jnp.asarray(x_nchw, jnp.float32), (0, 2, 3, 1))
    Cin = x.shape[-1]
    P = params["w1"].shape[0]
    s = int(stride)

    def conv(inp, w_oihw, stride_, pad):
        w_hwio = jnp.transpose(w_oihw, (2, 3, 1, 0))
        return jax.lax.conv_general_dilated(
            inp, w_hwio, (stride_, stride_), [(pad, pad), (pad, pad)],
            dimension_numbers=("NHWC", "HWIO", "NHWC"),
            precision=jax.lax.Precision.HIGHEST)

    def bn(t, g, b):
        m = jnp.mean(t, axis=(0, 1, 2), keepdims=True)
        v = jnp.mean((t - m) ** 2, axis=(0, 1, 2), keepdims=True)
        return (t - m) * jax.lax.rsqrt(v + _EPS) * g + b

    out = jax.nn.relu(bn(conv(x, params["w1"], s, 1), params["g1"], params["b1"]))
    out = bn(conv(out, params["w2"], 1, 1), params["g2"], params["b2"])
    if s != 1 or Cin != P:
        sc = bn(conv(x, params["wsc"], s, 0), params["gsc"], params["bsc"])
    else:
        sc = x
    return jnp.transpose(jax.nn.relu(sc + out), (0, 3, 1, 2))


def init_params(key, in_planes, planes, stride):
    ks = jax.random.split(key, 8)
    p = {
        "w1": jax.random.normal(ks[0], (planes, in_planes, 3, 3), jnp.float32) * 0.1,
        "g1": jax.random.uniform(ks[1], (planes,), jnp.float32, 0.5, 1.5),
        "b1": jax.random.normal(ks[2], (planes,), jnp.float32) * 0.1,
        "w2": jax.random.normal(ks[3], (planes, planes, 3, 3), jnp.float32) * 0.1,
        "g2": jax.random.uniform(ks[4], (planes,), jnp.float32, 0.5, 1.5),
        "b2": jax.random.normal(ks[5], (planes,), jnp.float32) * 0.1,
    }
    if stride != 1 or in_planes != planes:
        p["wsc"] = jax.random.normal(ks[6], (planes, in_planes, 1, 1), jnp.float32) * 0.1
        p["gsc"] = jax.random.uniform(ks[7], (planes,), jnp.float32, 0.5, 1.5)
        p["bsc"] = jnp.zeros((planes,), jnp.float32)
    return p


if __name__ == "__main__":
    key = jax.random.PRNGKey(0)
    kx1, kp1, kx2, kp2 = jax.random.split(key, 4)

    # Config A: downsampling block (stride=2, 4 -> 8 planes) => conv-shortcut path.
    N, Cin, H, W, planes, stride = 2, 4, 16, 16, 8, 2
    x = jax.random.normal(kx1, (N, Cin, H, W), jnp.float32)
    params = init_params(kp1, Cin, planes, stride)
    out = jax.block_until_ready(basic_block_forward(x, params, stride))
    ref = basic_block_reference(x, params, stride)
    assert out.shape == (N, planes, H // stride, W // stride)
    assert bool(jnp.all(jnp.isfinite(out)))
    assert bool(jnp.allclose(out, ref, rtol=5e-2, atol=5e-2))

    # Config B: identity-shortcut block (stride=1, 8 -> 8 planes) => fast path.
    N2, C2, H2, W2, planes2, stride2 = 2, 8, 16, 16, 8, 1
    x2 = jax.random.normal(kx2, (N2, C2, H2, W2), jnp.float32)
    params2 = init_params(kp2, C2, planes2, stride2)
    out2 = jax.block_until_ready(basic_block_forward(x2, params2, stride2))
    ref2 = basic_block_reference(x2, params2, stride2)
    assert out2.shape == (N2, planes2, H2, W2)
    assert bool(jnp.all(jnp.isfinite(out2)))
    assert bool(jnp.allclose(out2, ref2, rtol=5e-2, atol=5e-2))

    print("KERNEL_OK")
</pallas_src>

<mosaic_0001>
module attributes {stable_mosaic.version = 11 : i64} {
  func.func @_stage1_kernel_sc(%arg0: i32, %arg1: memref<2x4x9x9x4xbf16, #tpu.memory_space<vmem>>, %arg2: memref<3x12x8xbf16, #tpu.memory_space<vmem>>, %arg3: memref<4x8xbf16, #tpu.memory_space<vmem>>, %arg4: memref<2x8x8x8xbf16, #tpu.memory_space<vmem>>, %arg5: memref<2x8x8x8xbf16, #tpu.memory_space<vmem>>, %arg6: memref<1x1x8xf32, #tpu.memory_space<vmem>>, %arg7: memref<1x1x8xf32, #tpu.memory_space<vmem>>, %arg8: memref<1x1x8xf32, #tpu.memory_space<vmem>>, %arg9: memref<1x1x8xf32, #tpu.memory_space<vmem>>) attributes {dimension_semantics = [#tpu.dimension_semantics<parallel>], iteration_bounds = array<i64: 1>, scalar_prefetch = 0 : i64, scratch_operands = 0 : i64, tpu.core_type = #tpu.core_type<tc>, window_params = [{transform_indices = @transform_0, window_bounds = array<i64: 2, 4, 9, 9, 4>}, {pipeline_mode = #tpu.pipeline_mode<synchronous>, transform_indices = @transform_1, window_bounds = array<i64: 3, 12, 8>}, {pipeline_mode = #tpu.pipeline_mode<synchronous>, transform_indices = @transform_2, window_bounds = array<i64: 4, 8>}, {transform_indices = @transform_3, window_bounds = array<i64: 2, 8, 8, 8>}, {transform_indices = @transform_4, window_bounds = array<i64: 2, 8, 8, 8>}, {transform_indices = @transform_5, window_bounds = array<i64: 1, 1, 8>}, {transform_indices = @transform_6, window_bounds = array<i64: 1, 1, 8>}, {transform_indices = @transform_7, window_bounds = array<i64: 1, 1, 8>}, {transform_indices = @transform_8, window_bounds = array<i64: 1, 1, 8>}]} {
    %c0 = arith.constant 0 : index
    %c0_0 = arith.constant 0 : index
    %c0_1 = arith.constant 0 : index
    %c0_2 = arith.constant 0 : index
    %c0_3 = arith.constant 0 : index
    %0 = vector.load %arg1[%c0, %c0_0, %c0_1, %c0_2, %c0_3] : memref<2x4x9x9x4xbf16, #tpu.memory_space<vmem>>, vector<2x1x8x8x4xbf16>
    %1 = vector.shape_cast %0 : vector<2x1x8x8x4xbf16> to vector<2x8x8x4xbf16>
    %c0_4 = arith.constant 0 : index
    %c1 = arith.constant 1 : index
    %c0_5 = arith.constant 0 : index
    %c0_6 = arith.constant 0 : index
    %c0_7 = arith.constant 0 : index
    %2 = vector.load %arg1[%c0_4, %c1, %c0_5, %c0_6, %c0_7] : memref<2x4x9x9x4xbf16, #tpu.memory_space<vmem>>, vector<2x1x8x8x4xbf16>
    %3 = vector.shape_cast %2 : vector<2x1x8x8x4xbf16> to vector<2x8x8x4xbf16>
    %c0_8 = arith.constant 0 : index
    %c0_9 = arith.constant 0 : index
    %c0_10 = arith.constant 0 : index
    %c1_11 = arith.constant 1 : index
    %c0_12 = arith.constant 0 : index
    %4 = vector.load %arg1[%c0_8, %c0_9, %c0_10, %c1_11, %c0_12] : memref<2x4x9x9x4xbf16, #tpu.memory_space<vmem>>, vector<2x1x8x8x4xbf16>
    %5 = vector.shape_cast %4 : vector<2x1x8x8x4xbf16> to vector<2x8x8x4xbf16>
    %6 = tpu.concatenate %1, %3, %5 in 3 : vector<2x8x8x4xbf16>, vector<2x8x8x4xbf16>, vector<2x8x8x4xbf16> -> vector<2x8x8x12xbf16>
    %7 = vector.shape_cast %6 : vector<2x8x8x12xbf16> to vector<128x12xbf16>
    %c0_13 = arith.constant 0 : index
    %c0_14 = arith.constant 0 : index
    %c0_15 = arith.constant 0 : index
    %8 = vector.load %arg2[%c0_13, %c0_14, %c0_15] : memref<3x12x8xbf16, #tpu.memory_space<vmem>>, vector<1x12x8xbf16>
    %9 = vector.shape_cast %8 : vector<1x12x8xbf16> to vector<12x8xbf16>
    %cst = arith.constant dense<0.000000e+00> : vector<128x8xf32>
    %10 = tpu.matmul %7, %9, %cst {dimension_numbers = #tpu.dot_dimension_numbers<[1], [0], [0], [1], [0, 0, 1, 1], [], []>} : vector<128x12xbf16>, vector<12x8xbf16>, vector<128x8xf32> -> vector<128x8xf32>
    %c0_16 = arith.constant 0 : index
    %c2 = arith.constant 2 : index
    %c0_17 = arith.constant 0 : index
    %c0_18 = arith.constant 0 : index
    %c0_19 = arith.constant 0 : index
    %11 = vector.load %arg1[%c0_16, %c2, %c0_17, %c0_18, %c0_19] : memref<2x4x9x9x4xbf16, #tpu.memory_space<vmem>>, vector<2x1x8x8x4xbf16>
    %12 = vector.shape_cast %11 : vector<2x1x8x8x4xbf16> to vector<2x8x8x4xbf16>
    %c0_20 = arith.constant 0 : index
    %c3 = arith.constant 3 : index
    %c0_21 = arith.constant 0 : index
    %c0_22 = arith.constant 0 : index
    %c0_23 = arith.constant 0 : index
    %13 = vector.load %arg1[%c0_20, %c3, %c0_21, %c0_22, %c0_23] : memref<2x4x9x9x4xbf16, #tpu.memory_space<vmem>>, vector<2x1x8x8x4xbf16>
    %14 = vector.shape_cast %13 : vector<2x1x8x8x4xbf16> to vector<2x8x8x4xbf16>
    %c0_24 = arith.constant 0 : index
    %c2_25 = arith.constant 2 : index
    %c0_26 = arith.constant 0 : index
    %c1_27 = arith.constant 1 : index
    %c0_28 = arith.constant 0 : index
    %15 = vector.load %arg1[%c0_24, %c2_25, %c0_26, %c1_27, %c0_28] : memref<2x4x9x9x4xbf16, #tpu.memory_space<vmem>>, vector<2x1x8x8x4xbf16>
    %16 = vector.shape_cast %15 : vector<2x1x8x8x4xbf16> to vector<2x8x8x4xbf16>
    %17 = tpu.concatenate %12, %14, %16 in 3 : vector<2x8x8x4xbf16>, vector<2x8x8x4xbf16>, vector<2x8x8x4xbf16> -> vector<2x8x8x12xbf16>
    %18 = vector.shape_cast %17 : vector<2x8x8x12xbf16> to vector<128x12xbf16>
    %c1_29 = arith.constant 1 : index
    %c0_30 = arith.constant 0 : index
    %c0_31 = arith.constant 0 : index
    %19 = vector.load %arg2[%c1_29, %c0_30, %c0_31] : memref<3x12x8xbf16, #tpu.memory_space<vmem>>, vector<1x12x8xbf16>
    %20 = vector.shape_cast %19 : vector<1x12x8xbf16> to vector<12x8xbf16>
    %cst_32 = arith.constant dense<0.000000e+00> : vector<128x8xf32>
    %21 = tpu.matmul %18, %20, %cst_32 {dimension_numbers = #tpu.dot_dimension_numbers<[1], [0], [0], [1], [0, 0, 1, 1], [], []>} : vector<128x12xbf16>, vector<12x8xbf16>, vector<128x8xf32> -> vector<128x8xf32>
    %22 = arith.addf %10, %21 : vector<128x8xf32>
    %c0_33 = arith.constant 0 : index
    %c0_34 = arith.constant 0 : index
    %c1_35 = arith.constant 1 : index
    %c0_36 = arith.constant 0 : index
    %c0_37 = arith.constant 0 : index
    %23 = vector.load %arg1[%c0_33, %c0_34, %c1_35, %c0_36, %c0_37] : memref<2x4x9x9x4xbf16, #tpu.memory_space<vmem>>, vector<2x1x8x8x4xbf16>
    %24 = vector.shape_cast %23 : vector<2x1x8x8x4xbf16> to vector<2x8x8x4xbf16>
    %c0_38 = arith.constant 0 : index
    %c1_39 = arith.constant 1 : index
    %c1_40 = arith.constant 1 : index
    %c0_41 = arith.constant 0 : index
    %c0_42 = arith.constant 0 : index
    %25 = vector.load %arg1[%c0_38, %c1_39, %c1_40, %c0_41, %c0_42] : memref<2x4x9x9x4xbf16, #tpu.memory_space<vmem>>, vector<2x1x8x8x4xbf16>
    %26 = vector.shape_cast %25 : vector<2x1x8x8x4xbf16> to vector<2x8x8x4xbf16>
    %c0_43 = arith.constant 0 : index
    %c0_44 = arith.constant 0 : index
    %c1_45 = arith.constant 1 : index
    %c1_46 = arith.constant 1 : index
    %c0_47 = arith.constant 0 : index
    %27 = vector.load %arg1[%c0_43, %c0_44, %c1_45, %c1_46, %c0_47] : memref<2x4x9x9x4xbf16, #tpu.memory_space<vmem>>, vector<2x1x8x8x4xbf16>
    %28 = vector.shape_cast %27 : vector<2x1x8x8x4xbf16> to vector<2x8x8x4xbf16>
    %29 = tpu.concatenate %24, %26, %28 in 3 : vector<2x8x8x4xbf16>, vector<2x8x8x4xbf16>, vector<2x8x8x4xbf16> -> vector<2x8x8x12xbf16>
    %30 = vector.shape_cast %29 : vector<2x8x8x12xbf16> to vector<128x12xbf16>
    %c2_48 = arith.constant 2 : index
    %c0_49 = arith.constant 0 : index
    %c0_50 = arith.constant 0 : index
    %31 = vector.load %arg2[%c2_48, %c0_49, %c0_50] : memref<3x12x8xbf16, #tpu.memory_space<vmem>>, vector<1x12x8xbf16>
    %32 = vector.shape_cast %31 : vector<1x12x8xbf16> to vector<12x8xbf16>
    %cst_51 = arith.constant dense<0.000000e+00> : vector<128x8xf32>
    %33 = tpu.matmul %30, %32, %cst_51 {dimension_numbers = #tpu.dot_dimension_numbers<[1], [0], [0], [1], [0, 0, 1, 1], [], []>} : vector<128x12xbf16>, vector<12x8xbf16>, vector<128x8xf32> -> vector<128x8xf32>
    %34 = arith.addf %22, %33 : vector<128x8xf32>
    %c0_52 = arith.constant 0 : index
    %c3_53 = arith.constant 3 : index
    %c0_54 = arith.constant 0 : index
    %c0_55 = arith.constant 0 : index
    %c0_56 = arith.constant 0 : index
    %35 = vector.load %arg1[%c0_52, %c3_53, %c0_54, %c0_55, %c0_56] : memref<2x4x9x9x4xbf16, #tpu.memory_space<vmem>>, vector<2x1x8x8x4xbf16>
    %36 = vector.shape_cast %35 : vector<2x1x8x8x4xbf16> to vector<2x8x8x4xbf16>
    %37 = vector.shape_cast %36 : vector<2x8x8x4xbf16> to vector<128x4xbf16>
    %c0_57 = arith.constant 0 : index
    %c0_58 = arith.constant 0 : index
    %38 = vector.load %arg3[%c0_57, %c0_58] : memref<4x8xbf16, #tpu.memory_space<vmem>>, vector<4x8xbf16>
    %cst_59 = arith.constant dense<0.000000e+00> : vector<128x8xf32>
    %39 = tpu.matmul %37, %38, %cst_59 {dimension_numbers = #tpu.dot_dimension_numbers<[1], [0], [0], [1], [0, 0, 1, 1], [], []>} : vector<128x4xbf16>, vector<4x8xbf16>, vector<128x8xf32> -> vector<128x8xf32>
    %40 = vector.shape_cast %34 : vector<128x8xf32> to vector<2x8x8x8xf32>
    %41 = arith.truncf %40 : vector<2x8x8x8xf32> to vector<2x8x8x8xbf16>
    %c0_60 = arith.constant 0 : index
    %c0_61 = arith.constant 0 : index
    %c0_62 = arith.constant 0 : index
    %c0_63 = arith.constant 0 : index
    %42 = vector.load %arg4[%c0_60, %c0_61, %c0_62, %c0_63] : memref<2x8x8x8xbf16, #tpu.memory_space<vmem>>, vector<2x8x8x8xbf16>
    tpu.vector_store %arg4[%c0_60, %c0_61, %c0_62, %c0_63], %41 {strides = array<i32>} : memref<2x8x8x8xbf16, #tpu.memory_space<vmem>>, vector<2x8x8x8xbf16>,
    %43 = vector.shape_cast %39 : vector<128x8xf32> to vector<2x8x8x8xf32>
    %44 = arith.truncf %43 : vector<2x8x8x8xf32> to vector<2x8x8x8xbf16>
    %c0_64 = arith.constant 0 : index
    %c0_65 = arith.constant 0 : index
    %c0_66 = arith.constant 0 : index
    %c0_67 = arith.constant 0 : index
    %45 = vector.load %arg5[%c0_64, %c0_65, %c0_66, %c0_67] : memref<2x8x8x8xbf16, #tpu.memory_space<vmem>>, vector<2x8x8x8xbf16>
    tpu.vector_store %arg5[%c0_64, %c0_65, %c0_66, %c0_67], %44 {strides = array<i32>} : memref<2x8x8x8xbf16, #tpu.memory_space<vmem>>, vector<2x8x8x8xbf16>,
    %cst_68 = arith.constant dense<0.000000e+00> : vector<8xf32>
    %46 = vector.multi_reduction <add>, %34, %cst_68 [0] : vector<128x8xf32> to vector<8xf32>
    %47 = vector.shape_cast %46 : vector<8xf32> to vector<1x8xf32>
    %c0_69 = arith.constant 0 : index
    %c0_70 = arith.constant 0 : index
    %c0_71 = arith.constant 0 : index
    %48 = vector.load %arg6[%c0_69, %c0_70, %c0_71] : memref<1x1x8xf32, #tpu.memory_space<vmem>>, vector<1x1x8xf32>
    %49 = vector.shape_cast %48 : vector<1x1x8xf32> to vector<1x8xf32>
    %50 = vector.shape_cast %47 : vector<1x8xf32> to vector<1x1x8xf32>
    tpu.vector_store %arg6[%c0_69, %c0_70, %c0_71], %50 {strides = array<i32>} : memref<1x1x8xf32, #tpu.memory_space<vmem>>, vector<1x1x8xf32>,
    %51 = arith.mulf %34, %34 : vector<128x8xf32>
    %cst_72 = arith.constant dense<0.000000e+00> : vector<8xf32>
    %52 = vector.multi_reduction <add>, %51, %cst_72 [0] : vector<128x8xf32> to vector<8xf32>
    %53 = vector.shape_cast %52 : vector<8xf32> to vector<1x8xf32>
    %c0_73 = arith.constant 0 : index
    %c0_74 = arith.constant 0 : index
    %c0_75 = arith.constant 0 : index
    %54 = vector.load %arg7[%c0_73, %c0_74, %c0_75] : memref<1x1x8xf32, #tpu.memory_space<vmem>>, vector<1x1x8xf32>
    %55 = vector.shape_cast %54 : vector<1x1x8xf32> to vector<1x8xf32>
    %56 = vector.shape_cast %53 : vector<1x8xf32> to vector<1x1x8xf32>
    tpu.vector_store %arg7[%c0_73, %c0_74, %c0_75], %56 {strides = array<i32>} : memref<1x1x8xf32, #tpu.memory_space<vmem>>, vector<1x1x8xf32>,
    %cst_76 = arith.constant dense<0.000000e+00> : vector<8xf32>
    %57 = vector.multi_reduction <add>, %39, %cst_76 [0] : vector<128x8xf32> to vector<8xf32>
    %58 = vector.shape_cast %57 : vector<8xf32> to vector<1x8xf32>
    %c0_77 = arith.constant 0 : index
    %c0_78 = arith.constant 0 : index
    %c0_79 = arith.constant 0 : index
    %59 = vector.load %arg8[%c0_77, %c0_78, %c0_79] : memref<1x1x8xf32, #tpu.memory_space<vmem>>, vector<1x1x8xf32>
    %60 = vector.shape_cast %59 : vector<1x1x8xf32> to vector<1x8xf32>
    %61 = vector.shape_cast %58 : vector<1x8xf32> to vector<1x1x8xf32>
    tpu.vector_store %arg8[%c0_77, %c0_78, %c0_79], %61 {strides = array<i32>} : memref<1x1x8xf32, #tpu.memory_space<vmem>>, vector<1x1x8xf32>,
    %62 = arith.mulf %39, %39 : vector<128x8xf32>
    %cst_80 = arith.constant dense<0.000000e+00> : vector<8xf32>
    %63 = vector.multi_reduction <add>, %62, %cst_80 [0] : vector<128x8xf32> to vector<8xf32>
    %64 = vector.shape_cast %63 : vector<8xf32> to vector<1x8xf32>
    %c0_81 = arith.constant 0 : index
    %c0_82 = arith.constant 0 : index
    %c0_83 = arith.constant 0 : index
    %65 = vector.load %arg9[%c0_81, %c0_82, %c0_83] : memref<1x1x8xf32, #tpu.memory_space<vmem>>, vector<1x1x8xf32>
    %66 = vector.shape_cast %65 : vector<1x1x8xf32> to vector<1x8xf32>
    %67 = vector.shape_cast %64 : vector<1x8xf32> to vector<1x1x8xf32>
    tpu.vector_store %arg9[%c0_81, %c0_82, %c0_83], %67 {strides = array<i32>} : memref<1x1x8xf32, #tpu.memory_space<vmem>>, vector<1x1x8xf32>,
    return
  }
  func.func @transform_0(%arg0: i32) -> (i32, i32, i32, i32, i32) {
    %c0_i32 = arith.constant 0 : i32
    %c0_i32_0 = arith.constant 0 : i32
    %c0_i32_1 = arith.constant 0 : i32
    %c0_i32_2 = arith.constant 0 : i32
    %c0_i32_3 = arith.constant 0 : i32
    return %arg0, %c0_i32, %c0_i32_0, %c0_i32_1, %c0_i32_2 : i32, i32, i32, i32, i32
  }
  func.func @transform_1(%arg0: i32) -> (i32, i32, i32) {
    %c0_i32 = arith.constant 0 : i32
    %c0_i32_0 = arith.constant 0 : i32
    %c0_i32_1 = arith.constant 0 : i32
    %c0_i32_2 = arith.constant 0 : i32
    return %c0_i32, %c0_i32_0, %c0_i32_1 : i32, i32, i32
  }
  func.func @transform_2(%arg0: i32) -> (i32, i32) {
    %c0_i32 = arith.constant 0 : i32
    %c0_i32_0 = arith.constant 0 : i32
    %c0_i32_1 = arith.constant 0 : i32
    return %c0_i32, %c0_i32_0 : i32, i32
  }
  func.func @transform_3(%arg0: i32) -> (i32, i32, i32, i32) {
    %c0_i32 = arith.constant 0 : i32
    %c0_i32_0 = arith.constant 0 : i32
    %c0_i32_1 = arith.constant 0 : i32
    %c0_i32_2 = arith.constant 0 : i32
    return %arg0, %c0_i32, %c0_i32_0, %c0_i32_1 : i32, i32, i32, i32
  }
  func.func @transform_4(%arg0: i32) -> (i32, i32, i32, i32) {
    %c0_i32 = arith.constant 0 : i32
    %c0_i32_0 = arith.constant 0 : i32
    %c0_i32_1 = arith.constant 0 : i32
    %c0_i32_2 = arith.constant 0 : i32
    return %arg0, %c0_i32, %c0_i32_0, %c0_i32_1 : i32, i32, i32, i32
  }
  func.func @transform_5(%arg0: i32) -> (i32, i32, i32) {
    %c0_i32 = arith.constant 0 : i32
    %c0_i32_0 = arith.constant 0 : i32
    %c0_i32_1 = arith.constant 0 : i32
    return %arg0, %c0_i32, %c0_i32_0 : i32, i32, i32
  }
  func.func @transform_6(%arg0: i32) -> (i32, i32, i32) {
    %c0_i32 = arith.constant 0 : i32
    %c0_i32_0 = arith.constant 0 : i32
    %c0_i32_1 = arith.constant 0 : i32
    return %arg0, %c0_i32, %c0_i32_0 : i32, i32, i32
  }
  func.func @transform_7(%arg0: i32) -> (i32, i32, i32) {
    %c0_i32 = arith.constant 0 : i32
    %c0_i32_0 = arith.constant 0 : i32
    %c0_i32_1 = arith.constant 0 : i32
    return %arg0, %c0_i32, %c0_i32_0 : i32, i32, i32
  }
  func.func @transform_8(%arg0: i32) -> (i32, i32, i32) {
    %c0_i32 = arith.constant 0 : i32
    %c0_i32_0 = arith.constant 0 : i32
    %c0_i32_1 = arith.constant 0 : i32
    return %arg0, %c0_i32, %c0_i32_0 : i32, i32, i32
  }
}

</mosaic_0001>

<llo_original>
// kernel: tpu_custom_call.1
$region0: #{tpu_custom_call.1}
  #allocation0 [shape = 'u32[]', space=smem, size = 0x4, offset = 0x4, fixed_abs, tag = 'smem constant byte address 0x4 - core index']
  #allocation1 [shape = 'u32[144,128]{1,0:T(1,128)}', space=vmem, size = 0x12000, scoped, tag = 'internal scratch']
  %s0 = inlined_call_operand.vmem [shape: bf16[2,4,9,9,4], index: 0, kind: input, shape index: {}]
  %s1 = inlined_call_operand.vmem [shape: bf16[3,12,8], index: 1, kind: input, shape index: {}]
  %s2 = inlined_call_operand.vmem [shape: bf16[4,8], index: 2, kind: input, shape index: {}]
  %s3 = inlined_call_operand.hbm [shape: bf16[2,8,8,8], index: 3, kind: output, shape index: {0}]
  %s4 = inlined_call_operand.hbm [shape: bf16[2,8,8,8], index: 4, kind: output, shape index: {1}]
  %s5 = inlined_call_operand.hbm [shape: f32[1,1,8], index: 5, kind: output, shape index: {2}]
  %s6 = inlined_call_operand.hbm [shape: f32[1,1,8], index: 6, kind: output, shape index: {3}]
  %s7 = inlined_call_operand.hbm [shape: f32[1,1,8], index: 7, kind: output, shape index: {4}]
  %s8 = inlined_call_operand.hbm [shape: f32[1,1,8], index: 8, kind: output, shape index: {5}]
  %9 = xla_tuple %s3, %s4, %s5, %s6, %s7, %s8
  %s10 = sld [smem:[#allocation0]]
  $region62: #{tpu_custom_call.1} parent=0
    _
  %s12 = ssub.s32 1, %s10
  %s13 = scalar_select 0, %s12, %s10
  $region1: #{tpu_custom_call.1} parent=0
    #allocation2 [shape = 'u8[32768]{0}', space=vmem, size = 0x8000, scoped, tag = 'output window, operand 0, single buffered']
    #allocation3 [shape = 's32[1]{0}', space=sflag, size = 0x4, scoped, tag = 'scoped memory for tpu_custom_call.1']
    #allocation4 [shape = 'u8[32768]{0}', space=vmem, size = 0x8000, scoped, tag = 'output window, operand 1, single buffered']
    #allocation5 [shape = 's32[1]{0}', space=sflag, size = 0x4, scoped, tag = 'scoped memory for tpu_custom_call.1']
    #allocation6 [shape = 'u8[512]{0}', space=vmem, size = 0x400, scoped, tag = 'output window, operand 2, single buffered']
    #allocation7 [shape = 'u8[512]{0}', space=vmem, size = 0x400, scoped, tag = 'output window, operand 3, single buffered']
    #allocation8 [shape = 's32[1]{0}', space=sflag, size = 0x4, scoped, tag = 'scoped memory for tpu_custom_call.1']
    #allocation9 [shape = 'u8[512]{0}', space=vmem, size = 0x400, scoped, tag = 'output window, operand 4, single buffered']
    #allocation10 [shape = 'u8[512]{0}', space=vmem, size = 0x400, scoped, tag = 'output window, operand 5, single buffered']
    #allocation11 [shape = 's32[1]{0}', space=sflag, size = 0x4, scoped, tag = 'scoped memory for tpu_custom_call.1']
    %14 = vsyncpa [#allocation3], 0
    %15 = vsyncpa [#allocation5], 0
    %16 = vsyncpa [#allocation8], 0
    %17 = vsyncpa [#allocation11], 0
    // Predicated region
    $region2: #{tpu_custom_call.1} parent=1 // pred_check
      _
    $region3: #{tpu_custom_call.1} parent=1 // pred_check_branch
      %19 = sbr.rel (0) target = $region5
    $region4: #{tpu_custom_call.1} parent=1 // pred_region
      _
    $region5: #{tpu_custom_call.1} parent=1 // pred_fallthru
      _
    // Predicated region
    $region6: #{tpu_custom_call.1} parent=1 // pred_check
      _
    $region7: #{tpu_custom_call.1} parent=1 // pred_check_branch
      %21 = sbr.rel (0) target = $region9
    $region8: #{tpu_custom_call.1} parent=1 // pred_region
      _
    $region9: #{tpu_custom_call.1} parent=1 // pred_fallthru
      _
    // Predicated region
    $region10: #{tpu_custom_call.1} parent=1 // pred_check
      _
    $region11: #{tpu_custom_call.1} parent=1 // pred_check_branch
      %23 = sbr.rel (0) target = $region13
    $region12: #{tpu_custom_call.1} parent=1 // pred_region
      _
    $region13: #{tpu_custom_call.1} parent=1 // pred_fallthru
      _
    %v25 = vld [vmem:[%s0] sm:$0xf]
    %v26 = vld [vmem:[%s0 + $0x8] sm:$0xf]
    %v27 = vld [vmem:[%s0 + $0x10] sm:$0xf]
    %v28 = vld [vmem:[%s0 + $0x18] sm:$0xf]
    %v29 = vld [vmem:[%s0 + $0x20] sm:$0xf]
    %v30 = vld [vmem:[%s0 + $0x28] sm:$0xf]
    %v31 = vld [vmem:[%s0 + $0x30] sm:$0xf]
    %v32 = vld [vmem:[%s0 + $0x38] sm:$0xf]
    %v33 = vld [vmem:[%s0 + $0x120] sm:$0xf]
    %v34 = vld [vmem:[%s0 + $0x128] sm:$0xf]
    %v35 = vld [vmem:[%s0 + $0x130] sm:$0xf]
    %v36 = vld [vmem:[%s0 + $0x138] sm:$0xf]
    %v37 = vld [vmem:[%s0 + $0x140] sm:$0xf]
    %v38 = vld [vmem:[%s0 + $0x148] sm:$0xf]
    %v39 = vld [vmem:[%s0 + $0x150] sm:$0xf]
    %v40 = vld [vmem:[%s0 + $0x158] sm:$0xf]
    %s41 = scalar_lea.vmem %s0, 72
    %v42 = vld [vmem:[%s41] sm:$0xf]
    %v43 = vld [vmem:[%s41 + $0x8] sm:$0xf]
    %v44 = vld [vmem:[%s41 + $0x10] sm:$0xf]
    %v45 = vld [vmem:[%s41 + $0x18] sm:$0xf]
    %v46 = vld [vmem:[%s41 + $0x20] sm:$0xf]
    %v47 = vld [vmem:[%s41 + $0x28] sm:$0xf]
    %v48 = vld [vmem:[%s41 + $0x30] sm:$0xf]
    %v49 = vld [vmem:[%s41 + $0x38] sm:$0xf]
    %v50 = vld [vmem:[%s41 + $0x120] sm:$0xf]
    %v51 = vld [vmem:[%s41 + $0x128] sm:$0xf]
    %v52 = vld [vmem:[%s41 + $0x130] sm:$0xf]
    %v53 = vld [vmem:[%s41 + $0x138] sm:$0xf]
    %v54 = vld [vmem:[%s41 + $0x140] sm:$0xf]
    %v55 = vld [vmem:[%s41 + $0x148] sm:$0xf]
    %v56 = vld [vmem:[%s41 + $0x150] sm:$0xf]
    %v57 = vld [vmem:[%s41 + $0x158] sm:$0xf]
    %v58 = vld [vmem:[%s0 + $0x4] sm:$0x1]
    %v59 = vld [vmem:[%s0 + $0xc] sm:$0x1]
    %v60 = vld [vmem:[%s0 + $0x14] sm:$0x1]
    %v61 = vld [vmem:[%s0 + $0x1c] sm:$0x1]
    %v62 = vld [vmem:[%s0 + $0x24] sm:$0x1]
    %v63 = vld [vmem:[%s0 + $0x2c] sm:$0x1]
    %v64 = vld [vmem:[%s0 + $0x34] sm:$0x1]
    %v65 = vld [vmem:[%s0 + $0x3c] sm:$0x1]
    %v66 = vld [vmem:[%s0 + $0x124] sm:$0x1]
    %v67 = vld [vmem:[%s0 + $0x12c] sm:$0x1]
    %v68 = vld [vmem:[%s0 + $0x134] sm:$0x1]
    %v69 = vld [vmem:[%s0 + $0x13c] sm:$0x1]
    %v70 = vld [vmem:[%s0 + $0x144] sm:$0x1]
    %v71 = vld [vmem:[%s0 + $0x14c] sm:$0x1]
    %v72 = vld [vmem:[%s0 + $0x154] sm:$0x1]
    %v73 = vld [vmem:[%s0 + $0x15c] sm:$0x1]
    %v90 = vunpack.c.l.b16 %v42
    %v91 = vunpack.c.l.b16 %v43
    %v92 = vunpack.c.l.b16 %v44
    %v93 = vunpack.c.l.b16 %v45
    %v94 = vunpack.c.l.b16 %v46
    %v95 = vunpack.c.l.b16 %v47
    %v96 = vunpack.c.l.b16 %v48
    %v97 = vunpack.c.l.b16 %v49
    %v98 = vunpack.c.l.b16 %v50
    %v99 = vunpack.c.l.b16 %v51
    %v100 = vunpack.c.l.b16 %v52
    %v101 = vunpack.c.l.b16 %v53
    %v102 = vunpack.c.l.b16 %v54
    %v103 = vunpack.c.l.b16 %v55
    %v104 = vunpack.c.l.b16 %v56
    %v105 = vunpack.c.l.b16 %v57
    %v106 = vpack.c.b16 %v90, %v90
    %v107 = vpack.c.b16 %v91, %v91
    %v108 = vpack.c.b16 %v92, %v92
    %v109 = vpack.c.b16 %v93, %v93
    %v110 = vpack.c.b16 %v94, %v94
    %v111 = vpack.c.b16 %v95, %v95
    %v112 = vpack.c.b16 %v96, %v96
    %v113 = vpack.c.b16 %v97, %v97
    %v114 = vpack.c.b16 %v98, %v98
    %v115 = vpack.c.b16 %v99, %v99
    %v116 = vpack.c.b16 %v100, %v100
    %v117 = vpack.c.b16 %v101, %v101
    %v118 = vpack.c.b16 %v102, %v102
    %v119 = vpack.c.b16 %v103, %v103
    %v120 = vpack.c.b16 %v104, %v104
    %v121 = vpack.c.b16 %v105, %v105
    %122 = vrot.lane.b32.xlu0 %v106, 4
    %v123 = vpop.permute.xlu0 %122
    %124 = vrot.lane.b32.xlu0 %v107, 4
    %v125 = vpop.permute.xlu0 %124
    %126 = vrot.lane.b32.xlu0 %v108, 4
    %v127 = vpop.permute.xlu0 %126
    %128 = vrot.lane.b32.xlu0 %v109, 4
    %v129 = vpop.permute.xlu0 %128
    %130 = vrot.lane.b32.xlu0 %v110, 4
    %v131 = vpop.permute.xlu0 %130
    %132 = vrot.lane.b32.xlu0 %v111, 4
    %v133 = vpop.permute.xlu0 %132
    %134 = vrot.lane.b32.xlu0 %v112, 4
    %v135 = vpop.permute.xlu0 %134
    %136 = vrot.lane.b32.xlu0 %v113, 4
    %v137 = vpop.permute.xlu0 %136
    %138 = vrot.lane.b32.xlu0 %v114, 4
    %v139 = vpop.permute.xlu0 %138
    %140 = vrot.lane.b32.xlu0 %v115, 4
    %v141 = vpop.permute.xlu0 %140
    %142 = vrot.lane.b32.xlu0 %v116, 4
    %v143 = vpop.permute.xlu0 %142
    %144 = vrot.lane.b32.xlu0 %v117, 4
    %v145 = vpop.permute.xlu0 %144
    %146 = vrot.lane.b32.xlu0 %v118, 4
    %v147 = vpop.permute.xlu0 %146
    %148 = vrot.lane.b32.xlu0 %v119, 4
    %v149 = vpop.permute.xlu0 %148
    %150 = vrot.lane.b32.xlu0 %v120, 4
    %v151 = vpop.permute.xlu0 %150
    %152 = vrot.lane.b32.xlu0 %v121, 4
    %v153 = vpop.permute.xlu0 %152
    %v186 = vunpack.c.l.b16 %v25
    %v187 = vunpack.c.l.b16 %v58
    %v188 = vunpack.c.l.b16 %v26
    %v189 = vunpack.c.l.b16 %v59
    %v190 = vunpack.c.l.b16 %v27
    %v191 = vunpack.c.l.b16 %v60
    %v192 = vunpack.c.l.b16 %v28
    %v193 = vunpack.c.l.b16 %v61
    %v194 = vunpack.c.l.b16 %v29
    %v195 = vunpack.c.l.b16 %v62
    %v196 = vunpack.c.l.b16 %v30
    %v197 = vunpack.c.l.b16 %v63
    %v198 = vunpack.c.l.b16 %v31
    %v199 = vunpack.c.l.b16 %v64
    %v200 = vunpack.c.l.b16 %v32
    %v201 = vunpack.c.l.b16 %v65
    %v202 = vunpack.c.l.b16 %v33
    %v203 = vunpack.c.l.b16 %v66
    %v204 = vunpack.c.l.b16 %v34
    %v205 = vunpack.c.l.b16 %v67
    %v206 = vunpack.c.l.b16 %v35
    %v207 = vunpack.c.l.b16 %v68
    %v208 = vunpack.c.l.b16 %v36
    %v209 = vunpack.c.l.b16 %v69
    %v210 = vunpack.c.l.b16 %v37
    %v211 = vunpack.c.l.b16 %v70
    %v212 = vunpack.c.l.b16 %v38
    %v213 = vunpack.c.l.b16 %v71
    %v214 = vunpack.c.l.b16 %v39
    %v215 = vunpack.c.l.b16 %v72
    %v216 = vunpack.c.l.b16 %v40
    %v217 = vunpack.c.l.b16 %v73
    %v218 = vpack.c.b16 %v187, %v186
    %v219 = vpack.c.b16 %v189, %v188
    %v220 = vpack.c.b16 %v191, %v190
    %v221 = vpack.c.b16 %v193, %v192
    %v222 = vpack.c.b16 %v195, %v194
    %v223 = vpack.c.b16 %v197, %v196
    %v224 = vpack.c.b16 %v199, %v198
    %v225 = vpack.c.b16 %v201, %v200
    %v226 = vpack.c.b16 %v203, %v202
    %v227 = vpack.c.b16 %v205, %v204
    %v228 = vpack.c.b16 %v207, %v206
    %v229 = vpack.c.b16 %v209, %v208
    %v230 = vpack.c.b16 %v211, %v210
    %v231 = vpack.c.b16 %v213, %v212
    %v232 = vpack.c.b16 %v215, %v214
    %v233 = vpack.c.b16 %v217, %v216
    %v235 = vshrl.u32 %v218, 16
    %v237 = vshll.u32 %v218, 16
    %v239 = vrot.slane %v237, 1
    %v240 = vor.u32 %v235, %v239
    %v242 = vshrl.u32 %v219, 16
    %v244 = vshll.u32 %v219, 16
    %v246 = vrot.slane %v244, 1
    %v247 = vor.u32 %v242, %v246
    %v249 = vshrl.u32 %v220, 16
    %v251 = vshll.u32 %v220, 16
    %v253 = vrot.slane %v251, 1
    %v254 = vor.u32 %v249, %v253
    %v256 = vshrl.u32 %v221, 16
    %v258 = vshll.u32 %v221, 16
    %v260 = vrot.slane %v258, 1
    %v261 = vor.u32 %v256, %v260
    %v263 = vshrl.u32 %v222, 16
    %v265 = vshll.u32 %v222, 16
    %v267 = vrot.slane %v265, 1
    %v268 = vor.u32 %v263, %v267
    %v270 = vshrl.u32 %v223, 16
    %v272 = vshll.u32 %v223, 16
    %v274 = vrot.slane %v272, 1
    %v275 = vor.u32 %v270, %v274
    %v277 = vshrl.u32 %v224, 16
    %v279 = vshll.u32 %v224, 16
    %v281 = vrot.slane %v279, 1
    %v282 = vor.u32 %v277, %v281
    %v284 = vshrl.u32 %v225, 16
    %v286 = vshll.u32 %v225, 16
    %v288 = vrot.slane %v286, 1
    %v289 = vor.u32 %v284, %v288
    %v291 = vshrl.u32 %v226, 16
    %v293 = vshll.u32 %v226, 16
    %v295 = vrot.slane %v293, 1
    %v296 = vor.u32 %v291, %v295
    %v298 = vshrl.u32 %v227, 16
    %v300 = vshll.u32 %v227, 16
    %v302 = vrot.slane %v300, 1
    %v303 = vor.u32 %v298, %v302
    %v305 = vshrl.u32 %v228, 16
    %v307 = vshll.u32 %v228, 16
    %v309 = vrot.slane %v307, 1
    %v310 = vor.u32 %v305, %v309
    %v312 = vshrl.u32 %v229, 16
    %v314 = vshll.u32 %v229, 16
    %v316 = vrot.slane %v314, 1
    %v317 = vor.u32 %v312, %v316
    %v319 = vshrl.u32 %v230, 16
    %v321 = vshll.u32 %v230, 16
    %v323 = vrot.slane %v321, 1
    %v324 = vor.u32 %v319, %v323
    %v326 = vshrl.u32 %v231, 16
    %v328 = vshll.u32 %v231, 16
    %v330 = vrot.slane %v328, 1
    %v331 = vor.u32 %v326, %v330
    %v333 = vshrl.u32 %v232, 16
    %v335 = vshll.u32 %v232, 16
    %v337 = vrot.slane %v335, 1
    %v338 = vor.u32 %v333, %v337
    %v340 = vshrl.u32 %v233, 16
    %v342 = vshll.u32 %v233, 16
    %v344 = vrot.slane %v342, 1
    %v345 = vor.u32 %v340, %v344
    %346 = vrot.lane.b32.xlu0 %v240, 8
    %v347 = vpop.permute.xlu0 %346
    %348 = vrot.lane.b32.xlu0 %v247, 8
    %v349 = vpop.permute.xlu0 %348
    %350 = vrot.lane.b32.xlu0 %v254, 8
    %v351 = vpop.permute.xlu0 %350
    %352 = vrot.lane.b32.xlu0 %v261, 8
    %v353 = vpop.permute.xlu0 %352
    %354 = vrot.lane.b32.xlu0 %v268, 8
    %v355 = vpop.permute.xlu0 %354
    %356 = vrot.lane.b32.xlu0 %v275, 8
    %v357 = vpop.permute.xlu0 %356
    %358 = vrot.lane.b32.xlu0 %v282, 8
    %v359 = vpop.permute.xlu0 %358
    %360 = vrot.lane.b32.xlu0 %v289, 8
    %v361 = vpop.permute.xlu0 %360
    %362 = vrot.lane.b32.xlu0 %v296, 8
    %v363 = vpop.permute.xlu0 %362
    %364 = vrot.lane.b32.xlu0 %v303, 8
    %v365 = vpop.permute.xlu0 %364
    %366 = vrot.lane.b32.xlu0 %v310, 8
    %v367 = vpop.permute.xlu0 %366
    %368 = vrot.lane.b32.xlu0 %v317, 8
    %v369 = vpop.permute.xlu0 %368
    %370 = vrot.lane.b32.xlu0 %v324, 8
    %v371 = vpop.permute.xlu0 %370
    %372 = vrot.lane.b32.xlu0 %v331, 8
    %v373 = vpop.permute.xlu0 %372
    %374 = vrot.lane.b32.xlu0 %v338, 8
    %v375 = vpop.permute.xlu0 %374
    %376 = vrot.lane.b32.xlu0 %v345, 8
    %v377 = vpop.permute.xlu0 %376
    %vm378 = vcmask 31744
    %v381 = vsel %vm378, %v25, %v123
    %v384 = vsel %vm378, %v26, %v125
    %v387 = vsel %vm378, %v27, %v127
    %v390 = vsel %vm378, %v28, %v129
    %v393 = vsel %vm378, %v29, %v131
    %v396 = vsel %vm378, %v30, %v133
    %v399 = vsel %vm378, %v31, %v135
    %v402 = vsel %vm378, %v32, %v137
    %v405 = vsel %vm378, %v33, %v139
    %v408 = vsel %vm378, %v34, %v141
    %v411 = vsel %vm378, %v35, %v143
    %v414 = vsel %vm378, %v36, %v145
    %v417 = vsel %vm378, %v37, %v147
    %v420 = vsel %vm378, %v38, %v149
    %v423 = vsel %vm378, %v39, %v151
    %v426 = vsel %vm378, %v40, %v153
    %vm427 = vcmask 64512
    %v429 = vsel %vm427, %v381, %v347
    %v431 = vsel %vm427, %v384, %v349
    %v433 = vsel %vm427, %v387, %v351
    %v435 = vsel %vm427, %v390, %v353
    %v437 = vsel %vm427, %v393, %v355
    %v439 = vsel %vm427, %v396, %v357
    %v441 = vsel %vm427, %v399, %v359
    %v443 = vsel %vm427, %v402, %v361
    %v445 = vsel %vm427, %v405, %v363
    %v447 = vsel %vm427, %v408, %v365
    %v449 = vsel %vm427, %v411, %v367
    %v451 = vsel %vm427, %v414, %v369
    %v453 = vsel %vm427, %v417, %v371
    %v455 = vsel %vm427, %v420, %v373
    %v457 = vsel %vm427, %v423, %v375
    %v459 = vsel %vm427, %v426, %v377
    %v460 = vld [vmem:[%s1] sm:$0xf]
    %v461 = vld [vmem:[%s1 + $0x4] sm:$0x3]
    %s462 = scalar_lea.vmem %s0, 144
    %v463 = vld [vmem:[%s462] sm:$0xf]
    %v464 = vld [vmem:[%s462 + $0x8] sm:$0xf]
    %v465 = vld [vmem:[%s462 + $0x10] sm:$0xf]
    %v466 = vld [vmem:[%s462 + $0x18] sm:$0xf]
    %v467 = vld [vmem:[%s462 + $0x20] sm:$0xf]
    %v468 = vld [vmem:[%s462 + $0x28] sm:$0xf]
    %v469 = vld [vmem:[%s462 + $0x30] sm:$0xf]
    %v470 = vld [vmem:[%s462 + $0x38] sm:$0xf]
    %v471 = vld [vmem:[%s462 + $0x120] sm:$0xf]
    %v472 = vld [vmem:[%s462 + $0x128] sm:$0xf]
    %v473 = vld [vmem:[%s462 + $0x130] sm:$0xf]
    %v474 = vld [vmem:[%s462 + $0x138] sm:$0xf]
    %v475 = vld [vmem:[%s462 + $0x140] sm:$0xf]
    %v476 = vld [vmem:[%s462 + $0x148] sm:$0xf]
    %v477 = vld [vmem:[%s462 + $0x150] sm:$0xf]
    %v478 = vld [vmem:[%s462 + $0x158] sm:$0xf]
    %s479 = scalar_lea.vmem %s0, 216
    %v480 = vld [vmem:[%s479] sm:$0xf]
    %v481 = vld [vmem:[%s479 + $0x8] sm:$0xf]
    %v482 = vld [vmem:[%s479 + $0x10] sm:$0xf]
    %v483 = vld [vmem:[%s479 + $0x18] sm:$0xf]
    %v484 = vld [vmem:[%s479 + $0x20] sm:$0xf]
    %v485 = vld [vmem:[%s479 + $0x28] sm:$0xf]
    %v486 = vld [vmem:[%s479 + $0x30] sm:$0xf]
    %v487 = vld [vmem:[%s479 + $0x38] sm:$0xf]
    %v488 = vld [vmem:[%s479 + $0x120] sm:$0xf]
    %v489 = vld [vmem:[%s479 + $0x128] sm:$0xf]
    %v490 = vld [vmem:[%s479 + $0x130] sm:$0xf]
    %v491 = vld [vmem:[%s479 + $0x138] sm:$0xf]
    %v492 = vld [vmem:[%s479 + $0x140] sm:$0xf]
    %v493 = vld [vmem:[%s479 + $0x148] sm:$0xf]
    %v494 = vld [vmem:[%s479 + $0x150] sm:$0xf]
    %v495 = vld [vmem:[%s479 + $0x158] sm:$0xf]
    %v496 = vld [vmem:[%s462 + $0x4] sm:$0x1]
    %v497 = vld [vmem:[%s462 + $0xc] sm:$0x1]
    %v498 = vld [vmem:[%s462 + $0x14] sm:$0x1]
    %v499 = vld [vmem:[%s462 + $0x1c] sm:$0x1]
    %v500 = vld [vmem:[%s462 + $0x24] sm:$0x1]
    %v501 = vld [vmem:[%s462 + $0x2c] sm:$0x1]
    %v502 = vld [vmem:[%s462 + $0x34] sm:$0x1]
    %v503 = vld [vmem:[%s462 + $0x3c] sm:$0x1]
    %v504 = vld [vmem:[%s462 + $0x124] sm:$0x1]
    %v505 = vld [vmem:[%s462 + $0x12c] sm:$0x1]
    %v506 = vld [vmem:[%s462 + $0x134] sm:$0x1]
    %v507 = vld [vmem:[%s462 + $0x13c] sm:$0x1]
    %v508 = vld [vmem:[%s462 + $0x144] sm:$0x1]
    %v509 = vld [vmem:[%s462 + $0x14c] sm:$0x1]
    %v510 = vld [vmem:[%s462 + $0x154] sm:$0x1]
    %v511 = vld [vmem:[%s462 + $0x15c] sm:$0x1]
    %v528 = vunpack.c.l.b16 %v480
    %v529 = vunpack.c.l.b16 %v481
    %v530 = vunpack.c.l.b16 %v482
    %v531 = vunpack.c.l.b16 %v483
    %v532 = vunpack.c.l.b16 %v484
    %v533 = vunpack.c.l.b16 %v485
    %v534 = vunpack.c.l.b16 %v486
    %v535 = vunpack.c.l.b16 %v487
    %v536 = vunpack.c.l.b16 %v488
    %v537 = vunpack.c.l.b16 %v489
    %v538 = vunpack.c.l.b16 %v490
    %v539 = vunpack.c.l.b16 %v491
    %v540 = vunpack.c.l.b16 %v492
    %v541 = vunpack.c.l.b16 %v493
    %v542 = vunpack.c.l.b16 %v494
    %v543 = vunpack.c.l.b16 %v495
    %v544 = vpack.c.b16 %v528, %v528
    %v545 = vpack.c.b16 %v529, %v529
    %v546 = vpack.c.b16 %v530, %v530
    %v547 = vpack.c.b16 %v531, %v531
    %v548 = vpack.c.b16 %v532, %v532
    %v549 = vpack.c.b16 %v533, %v533
    %v550 = vpack.c.b16 %v534, %v534
    %v551 = vpack.c.b16 %v535, %v535
    %v552 = vpack.c.b16 %v536, %v536
    %v553 = vpack.c.b16 %v537, %v537
    %v554 = vpack.c.b16 %v538, %v538
    %v555 = vpack.c.b16 %v539, %v539
    %v556 = vpack.c.b16 %v540, %v540
    %v557 = vpack.c.b16 %v541, %v541
    %v558 = vpack.c.b16 %v542, %v542
    %v559 = vpack.c.b16 %v543, %v543
    %560 = vrot.lane.b32.xlu0 %v544, 4
    %v561 = vpop.permute.xlu0 %560
    %562 = vrot.lane.b32.xlu0 %v545, 4
    %v563 = vpop.permute.xlu0 %562
    %564 = vrot.lane.b32.xlu0 %v546, 4
    %v565 = vpop.permute.xlu0 %564
    %566 = vrot.lane.b32.xlu0 %v547, 4
    %v567 = vpop.permute.xlu0 %566
    %568 = vrot.lane.b32.xlu0 %v548, 4
    %v569 = vpop.permute.xlu0 %568
    %570 = vrot.lane.b32.xlu0 %v549, 4
    %v571 = vpop.permute.xlu0 %570
    %572 = vrot.lane.b32.xlu0 %v550, 4
    %v573 = vpop.permute.xlu0 %572
    %574 = vrot.lane.b32.xlu0 %v551, 4
    %v575 = vpop.permute.xlu0 %574
    %576 = vrot.lane.b32.xlu0 %v552, 4
    %v577 = vpop.permute.xlu0 %576
    %578 = vrot.lane.b32.xlu0 %v553, 4
    %v579 = vpop.permute.xlu0 %578
    %580 = vrot.lane.b32.xlu0 %v554, 4
    %v581 = vpop.permute.xlu0 %580
    %582 = vrot.lane.b32.xlu0 %v555, 4
    %v583 = vpop.permute.xlu0 %582
    %584 = vrot.lane.b32.xlu0 %v556, 4
    %v585 = vpop.permute.xlu0 %584
    %586 = vrot.lane.b32.xlu0 %v557, 4
    %v587 = vpop.permute.xlu0 %586
    %588 = vrot.lane.b32.xlu0 %v558, 4
    %v589 = vpop.permute.xlu0 %588
    %590 = vrot.lane.b32.xlu0 %v559, 4
    %v591 = vpop.permute.xlu0 %590
    %v624 = vunpack.c.l.b16 %v463
    %v625 = vunpack.c.l.b16 %v496
    %v626 = vunpack.c.l.b16 %v464
    %v627 = vunpack.c.l.b16 %v497
    %v628 = vunpack.c.l.b16 %v465
    %v629 = vunpack.c.l.b16 %v498
    %v630 = vunpack.c.l.b16 %v466
    %v631 = vunpack.c.l.b16 %v499
    %v632 = vunpack.c.l.b16 %v467
    %v633 = vunpack.c.l.b16 %v500
    %v634 = vunpack.c.l.b16 %v468
    %v635 = vunpack.c.l.b16 %v501
    %v636 = vunpack.c.l.b16 %v469
    %v637 = vunpack.c.l.b16 %v502
    %v638 = vunpack.c.l.b16 %v470
    %v639 = vunpack.c.l.b16 %v503
    %v640 = vunpack.c.l.b16 %v471
    %v641 = vunpack.c.l.b16 %v504
    %v642 = vunpack.c.l.b16 %v472
    %v643 = vunpack.c.l.b16 %v505
    %v644 = vunpack.c.l.b16 %v473
    %v645 = vunpack.c.l.b16 %v506
    %v646 = vunpack.c.l.b16 %v474
    %v647 = vunpack.c.l.b16 %v507
    %v648 = vunpack.c.l.b16 %v475
    %v649 = vunpack.c.l.b16 %v508
    %v650 = vunpack.c.l.b16 %v476
    %v651 = vunpack.c.l.b16 %v509
    %v652 = vunpack.c.l.b16 %v477
    %v653 = vunpack.c.l.b16 %v510
    %v654 = vunpack.c.l.b16 %v478
    %v655 = vunpack.c.l.b16 %v511
    %v656 = vpack.c.b16 %v625, %v624
    %v657 = vpack.c.b16 %v627, %v626
    %v658 = vpack.c.b16 %v629, %v628
    %v659 = vpack.c.b16 %v631, %v630
    %v660 = vpack.c.b16 %v633, %v632
    %v661 = vpack.c.b16 %v635, %v634
    %v662 = vpack.c.b16 %v637, %v636
    %v663 = vpack.c.b16 %v639, %v638
    %v664 = vpack.c.b16 %v641, %v640
    %v665 = vpack.c.b16 %v643, %v642
    %v666 = vpack.c.b16 %v645, %v644
    %v667 = vpack.c.b16 %v647, %v646
    %v668 = vpack.c.b16 %v649, %v648
    %v669 = vpack.c.b16 %v651, %v650
    %v670 = vpack.c.b16 %v653, %v652
    %v671 = vpack.c.b16 %v655, %v654
    %v673 = vshrl.u32 %v656, 16
    %v675 = vshll.u32 %v656, 16
    %v677 = vrot.slane %v675, 1
    %v678 = vor.u32 %v673, %v677
    %v680 = vshrl.u32 %v657, 16
    %v682 = vshll.u32 %v657, 16
    %v684 = vrot.slane %v682, 1
    %v685 = vor.u32 %v680, %v684
    %v687 = vshrl.u32 %v658, 16
    %v689 = vshll.u32 %v658, 16
    %v691 = vrot.slane %v689, 1
    %v692 = vor.u32 %v687, %v691
    %v694 = vshrl.u32 %v659, 16
    %v696 = vshll.u32 %v659, 16
    %v698 = vrot.slane %v696, 1
    %v699 = vor.u32 %v694, %v698
    %v701 = vshrl.u32 %v660, 16
    %v703 = vshll.u32 %v660, 16
    %v705 = vrot.slane %v703, 1
    %v706 = vor.u32 %v701, %v705
    %v708 = vshrl.u32 %v661, 16
    %v710 = vshll.u32 %v661, 16
    %v712 = vrot.slane %v710, 1
    %v713 = vor.u32 %v708, %v712
    %v715 = vshrl.u32 %v662, 16
    %v717 = vshll.u32 %v662, 16
    %v719 = vrot.slane %v717, 1
    %v720 = vor.u32 %v715, %v719
    %v722 = vshrl.u32 %v663, 16
    %v724 = vshll.u32 %v663, 16
    %v726 = vrot.slane %v724, 1
    %v727 = vor.u32 %v722, %v726
    %v729 = vshrl.u32 %v664, 16
    %v731 = vshll.u32 %v664, 16
    %v733 = vrot.slane %v731, 1
    %v734 = vor.u32 %v729, %v733
    %v736 = vshrl.u32 %v665, 16
    %v738 = vshll.u32 %v665, 16
    %v740 = vrot.slane %v738, 1
    %v741 = vor.u32 %v736, %v740
    %v743 = vshrl.u32 %v666, 16
    %v745 = vshll.u32 %v666, 16
    %v747 = vrot.slane %v745, 1
    %v748 = vor.u32 %v743, %v747
    %v750 = vshrl.u32 %v667, 16
    %v752 = vshll.u32 %v667, 16
    %v754 = vrot.slane %v752, 1
    %v755 = vor.u32 %v750, %v754
    %v757 = vshrl.u32 %v668, 16
    %v759 = vshll.u32 %v668, 16
    %v761 = vrot.slane %v759, 1
    %v762 = vor.u32 %v757, %v761
    %v764 = vshrl.u32 %v669, 16
    %v766 = vshll.u32 %v669, 16
    %v768 = vrot.slane %v766, 1
    %v769 = vor.u32 %v764, %v768
    %v771 = vshrl.u32 %v670, 16
    %v773 = vshll.u32 %v670, 16
    %v775 = vrot.slane %v773, 1
    %v776 = vor.u32 %v771, %v775
    %v778 = vshrl.u32 %v671, 16
    %v780 = vshll.u32 %v671, 16
    %v782 = vrot.slane %v780, 1
    %v783 = vor.u32 %v778, %v782
    %784 = vrot.lane.b32.xlu0 %v678, 8
    %v785 = vpop.permute.xlu0 %784
    %786 = vrot.lane.b32.xlu0 %v685, 8
    %v787 = vpop.permute.xlu0 %786
    %788 = vrot.lane.b32.xlu0 %v692, 8
    %v789 = vpop.permute.xlu0 %788
    %790 = vrot.lane.b32.xlu0 %v699, 8
    %v791 = vpop.permute.xlu0 %790
    %792 = vrot.lane.b32.xlu0 %v706, 8
    %v793 = vpop.permute.xlu0 %792
    %794 = vrot.lane.b32.xlu0 %v713, 8
    %v795 = vpop.permute.xlu0 %794
    %796 = vrot.lane.b32.xlu0 %v720, 8
    %v797 = vpop.permute.xlu0 %796
    %798 = vrot.lane.b32.xlu0 %v727, 8
    %v799 = vpop.permute.xlu0 %798
    %800 = vrot.lane.b32.xlu0 %v734, 8
    %v801 = vpop.permute.xlu0 %800
    %802 = vrot.lane.b32.xlu0 %v741, 8
    %v803 = vpop.permute.xlu0 %802
    %804 = vrot.lane.b32.xlu0 %v748, 8
    %v805 = vpop.permute.xlu0 %804
    %806 = vrot.lane.b32.xlu0 %v755, 8
    %v807 = vpop.permute.xlu0 %806
    %808 = vrot.lane.b32.xlu0 %v762, 8
    %v809 = vpop.permute.xlu0 %808
    %810 = vrot.lane.b32.xlu0 %v769, 8
    %v811 = vpop.permute.xlu0 %810
    %812 = vrot.lane.b32.xlu0 %v776, 8
    %v813 = vpop.permute.xlu0 %812
    %814 = vrot.lane.b32.xlu0 %v783, 8
    %v815 = vpop.permute.xlu0 %814
    %v818 = vsel %vm378, %v463, %v561
    %v821 = vsel %vm378, %v464, %v563
    %v824 = vsel %vm378, %v465, %v565
    %v827 = vsel %vm378, %v466, %v567
    %v830 = vsel %vm378, %v467, %v569
    %v833 = vsel %vm378, %v468, %v571
    %v836 = vsel %vm378, %v469, %v573
    %v839 = vsel %vm378, %v470, %v575
    %v842 = vsel %vm378, %v471, %v577
    %v845 = vsel %vm378, %v472, %v579
    %v848 = vsel %vm378, %v473, %v581
    %v851 = vsel %vm378, %v474, %v583
    %v854 = vsel %vm378, %v475, %v585
    %v857 = vsel %vm378, %v476, %v587
    %v860 = vsel %vm378, %v477, %v589
    %v863 = vsel %vm378, %v478, %v591
    %v865 = vsel %vm427, %v818, %v785
    %v867 = vsel %vm427, %v821, %v787
    %v869 = vsel %vm427, %v824, %v789
    %v871 = vsel %vm427, %v827, %v791
    %v873 = vsel %vm427, %v830, %v793
    %v875 = vsel %vm427, %v833, %v795
    %v877 = vsel %vm427, %v836, %v797
    %v879 = vsel %vm427, %v839, %v799
    %v881 = vsel %vm427, %v842, %v801
    %v883 = vsel %vm427, %v845, %v803
    %v885 = vsel %vm427, %v848, %v805
    %v887 = vsel %vm427, %v851, %v807
    %v889 = vsel %vm427, %v854, %v809
    %v891 = vsel %vm427, %v857, %v811
    %v893 = vsel %vm427, %v860, %v813
    %v895 = vsel %vm427, %v863, %v815
    %s896 = scalar_lea.vmem %s1, 8
    %v897 = vld [vmem:[%s896] sm:$0xf]
    %v898 = vld [vmem:[%s896 + $0x4] sm:$0x3]
    %v915 = vunpack.c.l.b16 %v865
    %v916 = vunpack.c.l.b16 %v867
    %v917 = vunpack.c.l.b16 %v869
    %v918 = vunpack.c.l.b16 %v871
    %v919 = vunpack.c.l.b16 %v873
    %v920 = vunpack.c.l.b16 %v875
    %v921 = vunpack.c.l.b16 %v877
    %v922 = vunpack.c.l.b16 %v879
    %v923 = vunpack.c.l.b16 %v881
    %v924 = vunpack.c.l.b16 %v883
    %v925 = vunpack.c.l.b16 %v885
    %v926 = vunpack.c.l.b16 %v887
    %v927 = vunpack.c.l.b16 %v889
    %v928 = vunpack.c.l.b16 %v891
    %v929 = vunpack.c.l.b16 %v893
    %v930 = vunpack.c.l.b16 %v895
    %v931 = vpack.c.b16 %v916, %v915
    %v932 = vpack.c.b16 %v918, %v917
    %v933 = vpack.c.b16 %v920, %v919
    %v934 = vpack.c.b16 %v922, %v921
    %v935 = vpack.c.b16 %v924, %v923
    %v936 = vpack.c.b16 %v926, %v925
    %v937 = vpack.c.b16 %v928, %v927
    %v938 = vpack.c.b16 %v930, %v929
    %v941 = vunpack.c.l.b16 %v897
    %v942 = vunpack.c.l.b16 %v898
    %v943 = vpack.c.b16 %v942, %v941
    %vm944 = vcmask 97280
    %v946 = vsel %vm944, %v931, 0
    %v949 = vsel %vm944, %v932, 0
    %v952 = vsel %vm944, %v933, 0
    %v955 = vsel %vm944, %v934, 0
    %v958 = vsel %vm944, %v935, 0
    %v961 = vsel %vm944, %v936, 0
    %v964 = vsel %vm944, %v937, 0
    %v967 = vsel %vm944, %v938, 0
    %vm969 = vcmask 1045504
    %v971 = vsel %vm969, %v943, 0
    %973 = vmatprep.subr.bf16.mxu0 0
    %974 = vmatpush1.bf16.msra.mxu0 %v971
    %975 = vmatprep.subr.bf16.mxu0 0
    %976 = vmatpush1.bf16.msra.mxu0 0
    %977 = vmatprep.subr.bf16.mxu0 0
    %978 = vmatpush1.bf16.msra.mxu0 0
    %979 = vmatprep.subr.bf16.mxu0 0
    %980 = vmatpush1.bf16.msra.mxu0 0
    %981 = vmatprep.subr.bf16.mxu0 0
    %982 = vmatpush1.bf16.msra.mxu0 0
    %983 = vmatprep.subr.bf16.mxu0 0
    %984 = vmatpush1.bf16.msra.mxu0 0
    %985 = vmatprep.subr.bf16.mxu0 0
    %986 = vmatpush1.bf16.msra.mxu0 0
    %987 = vmatprep.subr.bf16.mxu0 0
    %988 = vmatpush1.bf16.msra.mxu0 0
    %989 = vmatprep.subr.bf16.mxu0 0
    %990 = vmatpush1.bf16.msra.mxu0 0
    %991 = vmatprep.subr.bf16.mxu0 0
    %992 = vmatpush1.bf16.msra.mxu0 0
    %993 = vmatprep.subr.bf16.mxu0 0
    %994 = vmatpush1.bf16.msra.mxu0 0
    %995 = vmatprep.subr.bf16.mxu0 0
    %996 = vmatpush1.bf16.msra.mxu0 0
    %997 = vmatprep.subr.bf16.mxu0 0
    %998 = vmatpush1.bf16.msra.mxu0 0
    %999 = vmatprep.subr.bf16.mxu0 0
    %1000 = vmatpush1.bf16.msra.mxu0 0
    %1001 = vmatprep.subr.bf16.mxu0 0
    %1002 = vmatpush1.bf16.msra.mxu0 0
    %1003 = vmatprep.subr.bf16.mxu0 0
    %1004 = vmatpush1.bf16.msra.mxu0 0
    %1005 = vmatprep.mubr.bf16.mxu0 0
    %1006 = vmatmul.mubr.bf16.gmra.mrb[0].mxu0 %v946
    %v1007 = vpop.f32.mrb[0].mxu0
    %v1008 = vadd.f32 0.0, %v1007
    %v1009 = vpop.f32.mrb[0].mxu0
    %v1010 = vpop.f32.mrb[0].mxu0
    %v1011 = vadd.f32 0.0, %v1010
    %v1012 = vpop.f32.mrb[0].mxu0
    %1013 = vmatprep.mubr.bf16.mxu0 0
    %1014 = vmatmul.mubr.bf16.gmra.mrb[0].mxu0 %v949
    %v1015 = vpop.f32.mrb[0].mxu0
    %v1016 = vadd.f32 0.0, %v1015
    %v1017 = vpop.f32.mrb[0].mxu0
    %v1018 = vpop.f32.mrb[0].mxu0
    %v1019 = vadd.f32 0.0, %v1018
    %v1020 = vpop.f32.mrb[0].mxu0
    %1021 = vmatprep.mubr.bf16.mxu0 0
    %1022 = vmatmul.mubr.bf16.gmra.mrb[0].mxu0 %v952
    %v1023 = vpop.f32.mrb[0].mxu0
    %v1024 = vadd.f32 0.0, %v1023
    %v1025 = vpop.f32.mrb[0].mxu0
    %v1026 = vpop.f32.mrb[0].mxu0
    %v1027 = vadd.f32 0.0, %v1026
    %v1028 = vpop.f32.mrb[0].mxu0
    %1029 = vmatprep.mubr.bf16.mxu0 0
    %1030 = vmatmul.mubr.bf16.gmra.mrb[0].mxu0 %v955
    %v1031 = vpop.f32.mrb[0].mxu0
    %v1032 = vadd.f32 0.0, %v1031
    %v1033 = vpop.f32.mrb[0].mxu0
    %v1034 = vpop.f32.mrb[0].mxu0
    %v1035 = vadd.f32 0.0, %v1034
    %v1036 = vpop.f32.mrb[0].mxu0
    %1037 = vmatprep.mubr.bf16.mxu0 0
    %1038 = vmatmul.mubr.bf16.gmra.mrb[0].mxu0 %v958
    %v1039 = vpop.f32.mrb[0].mxu0
    %v1040 = vadd.f32 0.0, %v1039
    %v1041 = vpop.f32.mrb[0].mxu0
    %v1042 = vpop.f32.mrb[0].mxu0
    %v1043 = vadd.f32 0.0, %v1042
    %v1044 = vpop.f32.mrb[0].mxu0
    %1045 = vmatprep.mubr.bf16.mxu0 0
    %1046 = vmatmul.mubr.bf16.gmra.mrb[0].mxu0 %v961
    %v1047 = vpop.f32.mrb[0].mxu0
    %v1048 = vadd.f32 0.0, %v1047
    %v1049 = vpop.f32.mrb[0].mxu0
    %v1050 = vpop.f32.mrb[0].mxu0
    %v1051 = vadd.f32 0.0, %v1050
    %v1052 = vpop.f32.mrb[0].mxu0
    %1053 = vmatprep.mubr.bf16.mxu0 0
    %1054 = vmatmul.mubr.bf16.gmra.mrb[0].mxu0 %v964
    %v1055 = vpop.f32.mrb[0].mxu0
    %v1056 = vadd.f32 0.0, %v1055
    %v1057 = vpop.f32.mrb[0].mxu0
    %v1058 = vpop.f32.mrb[0].mxu0
    %v1059 = vadd.f32 0.0, %v1058
    %v1060 = vpop.f32.mrb[0].mxu0
    %1061 = vmatprep.mubr.bf16.mxu0 0
    %1062 = vmatmul.mubr.bf16.gmra.mrb[0].mxu0 %v967
    %v1063 = vpop.f32.mrb[0].mxu0
    %v1064 = vadd.f32 0.0, %v1063
    %v1065 = vpop.f32.mrb[0].mxu0
    %v1066 = vpop.f32.mrb[0].mxu0
    %v1067 = vadd.f32 0.0, %v1066
    %v1068 = vpop.f32.mrb[0].mxu0
    %1069 = vdwg.mxu0
    %v1086 = vunpack.c.l.b16 %v429
    %v1087 = vunpack.c.l.b16 %v431
    %v1088 = vunpack.c.l.b16 %v433
    %v1089 = vunpack.c.l.b16 %v435
    %v1090 = vunpack.c.l.b16 %v437
    %v1091 = vunpack.c.l.b16 %v439
    %v1092 = vunpack.c.l.b16 %v441
    %v1093 = vunpack.c.l.b16 %v443
    %v1094 = vunpack.c.l.b16 %v445
    %v1095 = vunpack.c.l.b16 %v447
    %v1096 = vunpack.c.l.b16 %v449
    %v1097 = vunpack.c.l.b16 %v451
    %v1098 = vunpack.c.l.b16 %v453
    %v1099 = vunpack.c.l.b16 %v455
    %v1100 = vunpack.c.l.b16 %v457
    %v1101 = vunpack.c.l.b16 %v459
    %v1102 = vpack.c.b16 %v1087, %v1086
    %v1103 = vpack.c.b16 %v1089, %v1088
    %v1104 = vpack.c.b16 %v1091, %v1090
    %v1105 = vpack.c.b16 %v1093, %v1092
    %v1106 = vpack.c.b16 %v1095, %v1094
    %v1107 = vpack.c.b16 %v1097, %v1096
    %v1108 = vpack.c.b16 %v1099, %v1098
    %v1109 = vpack.c.b16 %v1101, %v1100
    %v1112 = vunpack.c.l.b16 %v460
    %v1113 = vunpack.c.l.b16 %v461
    %v1114 = vpack.c.b16 %v1113, %v1112
    %v1116 = vsel %vm944, %v1102, 0
    %v1119 = vsel %vm944, %v1103, 0
    %v1122 = vsel %vm944, %v1104, 0
    %v1125 = vsel %vm944, %v1105, 0
    %v1128 = vsel %vm944, %v1106, 0
    %v1131 = vsel %vm944, %v1107, 0
    %v1134 = vsel %vm944, %v1108, 0
    %v1137 = vsel %vm944, %v1109, 0
    %v1140 = vsel %vm969, %v1114, 0
    %1142 = vmatprep.subr.bf16.mxu0 0
    %1143 = vmatpush1.bf16.msra.mxu0 %v1140
    %1144 = vmatprep.subr.bf16.mxu0 0
    %1145 = vmatpush1.bf16.msra.mxu0 0
    %1146 = vmatprep.subr.bf16.mxu0 0
    %1147 = vmatpush1.bf16.msra.mxu0 0
    %1148 = vmatprep.subr.bf16.mxu0 0
    %1149 = vmatpush1.bf16.msra.mxu0 0
    %1150 = vmatprep.subr.bf16.mxu0 0
    %1151 = vmatpush1.bf16.msra.mxu0 0
    %1152 = vmatprep.subr.bf16.mxu0 0
    %1153 = vmatpush1.bf16.msra.mxu0 0
    %1154 = vmatprep.subr.bf16.mxu0 0
    %1155 = vmatpush1.bf16.msra.mxu0 0
    %1156 = vmatprep.subr.bf16.mxu0 0
    %1157 = vmatpush1.bf16.msra.mxu0 0
    %1158 = vmatprep.subr.bf16.mxu0 0
    %1159 = vmatpush1.bf16.msra.mxu0 0
    %1160 = vmatprep.subr.bf16.mxu0 0
    %1161 = vmatpush1.bf16.msra.mxu0 0
    %1162 = vmatprep.subr.bf16.mxu0 0
    %1163 = vmatpush1.bf16.msra.mxu0 0
    %1164 = vmatprep.subr.bf16.mxu0 0
    %1165 = vmatpush1.bf16.msra.mxu0 0
    %1166 = vmatprep.subr.bf16.mxu0 0
    %1167 = vmatpush1.bf16.msra.mxu0 0
    %1168 = vmatprep.subr.bf16.mxu0 0
    %1169 = vmatpush1.bf16.msra.mxu0 0
    %1170 = vmatprep.subr.bf16.mxu0 0
    %1171 = vmatpush1.bf16.msra.mxu0 0
    %1172 = vmatprep.subr.bf16.mxu0 0
    %1173 = vmatpush1.bf16.msra.mxu0 0
    %1174 = vmatprep.mubr.bf16.mxu0 0
    %1175 = vmatmul.mubr.bf16.gmra.mrb[0].mxu0 %v1116
    %v1176 = vpop.f32.mrb[0].mxu0
    %v1177 = vadd.f32 %v1008, %v1176
    %v1178 = vpop.f32.mrb[0].mxu0
    %v1179 = vpop.f32.mrb[0].mxu0
    %v1180 = vadd.f32 %v1011, %v1179
    %v1181 = vpop.f32.mrb[0].mxu0
    %1182 = vmatprep.mubr.bf16.mxu0 0
    %1183 = vmatmul.mubr.bf16.gmra.mrb[0].mxu0 %v1119
    %v1184 = vpop.f32.mrb[0].mxu0
    %v1185 = vadd.f32 %v1016, %v1184
    %v1186 = vpop.f32.mrb[0].mxu0
    %v1187 = vpop.f32.mrb[0].mxu0
    %v1188 = vadd.f32 %v1019, %v1187
    %v1189 = vpop.f32.mrb[0].mxu0
    %1190 = vmatprep.mubr.bf16.mxu0 0
    %1191 = vmatmul.mubr.bf16.gmra.mrb[0].mxu0 %v1122
    %v1192 = vpop.f32.mrb[0].mxu0
    %v1193 = vadd.f32 %v1024, %v1192
    %v1194 = vpop.f32.mrb[0].mxu0
    %v1195 = vpop.f32.mrb[0].mxu0
    %v1196 = vadd.f32 %v1027, %v1195
    %v1197 = vpop.f32.mrb[0].mxu0
    %1198 = vmatprep.mubr.bf16.mxu0 0
    %1199 = vmatmul.mubr.bf16.gmra.mrb[0].mxu0 %v1125
    %v1200 = vpop.f32.mrb[0].mxu0
    %v1201 = vadd.f32 %v1032, %v1200
    %v1202 = vpop.f32.mrb[0].mxu0
    %v1203 = vpop.f32.mrb[0].mxu0
    %v1204 = vadd.f32 %v1035, %v1203
    %v1205 = vpop.f32.mrb[0].mxu0
    %1206 = vmatprep.mubr.bf16.mxu0 0
    %1207 = vmatmul.mubr.bf16.gmra.mrb[0].mxu0 %v1128
    %v1208 = vpop.f32.mrb[0].mxu0
    %v1209 = vadd.f32 %v1040, %v1208
    %v1210 = vpop.f32.mrb[0].mxu0
    %v1211 = vpop.f32.mrb[0].mxu0
    %v1212 = vadd.f32 %v1043, %v1211
    %v1213 = vpop.f32.mrb[0].mxu0
    %1214 = vmatprep.mubr.bf16.mxu0 0
    %1215 = vmatmul.mubr.bf16.gmra.mrb[0].mxu0 %v1131
    %v1216 = vpop.f32.mrb[0].mxu0
    %v1217 = vadd.f32 %v1048, %v1216
    %v1218 = vpop.f32.mrb[0].mxu0
    %v1219 = vpop.f32.mrb[0].mxu0
    %v1220 = vadd.f32 %v1051, %v1219
    %v1221 = vpop.f32.mrb[0].mxu0
    %1222 = vmatprep.mubr.bf16.mxu0 0
    %1223 = vmatmul.mubr.bf16.gmra.mrb[0].mxu0 %v1134
    %v1224 = vpop.f32.mrb[0].mxu0
    %v1225 = vadd.f32 %v1056, %v1224
    %v1226 = vpop.f32.mrb[0].mxu0
    %v1227 = vpop.f32.mrb[0].mxu0
    %v1228 = vadd.f32 %v1059, %v1227
    %v1229 = vpop.f32.mrb[0].mxu0
    %1230 = vmatprep.mubr.bf16.mxu0 0
    %1231 = vmatmul.mubr.bf16.gmra.mrb[0].mxu0 %v1137
    %v1232 = vpop.f32.mrb[0].mxu0
    %v1233 = vadd.f32 %v1064, %v1232
    %v1234 = vpop.f32.mrb[0].mxu0
    %v1235 = vpop.f32.mrb[0].mxu0
    %v1236 = vadd.f32 %v1067, %v1235
    %v1237 = vpop.f32.mrb[0].mxu0
    %1238 = vdwg.mxu0
    %s1239 = scalar_lea.vmem %s0, 8
    %v1240 = vld [vmem:[%s1239] sm:$0xf]
    %v1241 = vld [vmem:[%s1239 + $0x8] sm:$0xf]
    %v1242 = vld [vmem:[%s1239 + $0x10] sm:$0xf]
    %v1243 = vld [vmem:[%s1239 + $0x18] sm:$0xf]
    %v1244 = vld [vmem:[%s1239 + $0x20] sm:$0xf]
    %v1245 = vld [vmem:[%s1239 + $0x28] sm:$0xf]
    %v1246 = vld [vmem:[%s1239 + $0x30] sm:$0xf]
    %v1247 = vld [vmem:[%s1239 + $0x38] sm:$0xf]
    %v1248 = vld [vmem:[%s1239 + $0x120] sm:$0xf]
    %v1249 = vld [vmem:[%s1239 + $0x128] sm:$0xf]
    %v1250 = vld [vmem:[%s1239 + $0x130] sm:$0xf]
    %v1251 = vld [vmem:[%s1239 + $0x138] sm:$0xf]
    %v1252 = vld [vmem:[%s1239 + $0x140] sm:$0xf]
    %v1253 = vld [vmem:[%s1239 + $0x148] sm:$0xf]
    %v1254 = vld [vmem:[%s1239 + $0x150] sm:$0xf]
    %v1255 = vld [vmem:[%s1239 + $0x158] sm:$0xf]
    %s1256 = scalar_lea.vmem %s0, 80
    %v1257 = vld [vmem:[%s1256] sm:$0xf]
    %v1258 = vld [vmem:[%s1256 + $0x8] sm:$0xf]
    %v1259 = vld [vmem:[%s1256 + $0x10] sm:$0xf]
    %v1260 = vld [vmem:[%s1256 + $0x18] sm:$0xf]
    %v1261 = vld [vmem:[%s1256 + $0x20] sm:$0xf]
    %v1262 = vld [vmem:[%s1256 + $0x28] sm:$0xf]
    %v1263 = vld [vmem:[%s1256 + $0x30] sm:$0xf]
    %v1264 = vld [vmem:[%s1256 + $0x38] sm:$0xf]
    %v1265 = vld [vmem:[%s1256 + $0x120] sm:$0xf]
    %v1266 = vld [vmem:[%s1256 + $0x128] sm:$0xf]
    %v1267 = vld [vmem:[%s1256 + $0x130] sm:$0xf]
    %v1268 = vld [vmem:[%s1256 + $0x138] sm:$0xf]
    %v1269 = vld [vmem:[%s1256 + $0x140] sm:$0xf]
    %v1270 = vld [vmem:[%s1256 + $0x148] sm:$0xf]
    %v1271 = vld [vmem:[%s1256 + $0x150] sm:$0xf]
    %v1272 = vld [vmem:[%s1256 + $0x158] sm:$0xf]
    %v1273 = vld [vmem:[%s1239 + $0x4] sm:$0x1]
    %v1274 = vld [vmem:[%s1239 + $0xc] sm:$0x1]
    %v1275 = vld [vmem:[%s1239 + $0x14] sm:$0x1]
    %v1276 = vld [vmem:[%s1239 + $0x1c] sm:$0x1]
    %v1277 = vld [vmem:[%s1239 + $0x24] sm:$0x1]
    %v1278 = vld [vmem:[%s1239 + $0x2c] sm:$0x1]
    %v1279 = vld [vmem:[%s1239 + $0x34] sm:$0x1]
    %v1280 = vld [vmem:[%s1239 + $0x3c] sm:$0x1]
    %v1281 = vld [vmem:[%s1239 + $0x124] sm:$0x1]
    %v1282 = vld [vmem:[%s1239 + $0x12c] sm:$0x1]
    %v1283 = vld [vmem:[%s1239 + $0x134] sm:$0x1]
    %v1284 = vld [vmem:[%s1239 + $0x13c] sm:$0x1]
    %v1285 = vld [vmem:[%s1239 + $0x144] sm:$0x1]
    %v1286 = vld [vmem:[%s1239 + $0x14c] sm:$0x1]
    %v1287 = vld [vmem:[%s1239 + $0x154] sm:$0x1]
    %v1288 = vld [vmem:[%s1239 + $0x15c] sm:$0x1]
    %v1305 = vunpack.c.l.b16 %v1257
    %v1306 = vunpack.c.l.b16 %v1258
    %v1307 = vunpack.c.l.b16 %v1259
    %v1308 = vunpack.c.l.b16 %v1260
    %v1309 = vunpack.c.l.b16 %v1261
    %v1310 = vunpack.c.l.b16 %v1262
    %v1311 = vunpack.c.l.b16 %v1263
    %v1312 = vunpack.c.l.b16 %v1264
    %v1313 = vunpack.c.l.b16 %v1265
    %v1314 = vunpack.c.l.b16 %v1266
    %v1315 = vunpack.c.l.b16 %v1267
    %v1316 = vunpack.c.l.b16 %v1268
    %v1317 = vunpack.c.l.b16 %v1269
    %v1318 = vunpack.c.l.b16 %v1270
    %v1319 = vunpack.c.l.b16 %v1271
    %v1320 = vunpack.c.l.b16 %v1272
    %v1321 = vpack.c.b16 %v1305, %v1305
    %v1322 = vpack.c.b16 %v1306, %v1306
    %v1323 = vpack.c.b16 %v1307, %v1307
    %v1324 = vpack.c.b16 %v1308, %v1308
    %v1325 = vpack.c.b16 %v1309, %v1309
    %v1326 = vpack.c.b16 %v1310, %v1310
    %v1327 = vpack.c.b16 %v1311, %v1311
    %v1328 = vpack.c.b16 %v1312, %v1312
    %v1329 = vpack.c.b16 %v1313, %v1313
    %v1330 = vpack.c.b16 %v1314, %v1314
    %v1331 = vpack.c.b16 %v1315, %v1315
    %v1332 = vpack.c.b16 %v1316, %v1316
    %v1333 = vpack.c.b16 %v1317, %v1317
    %v1334 = vpack.c.b16 %v1318, %v1318
    %v1335 = vpack.c.b16 %v1319, %v1319
    %v1336 = vpack.c.b16 %v1320, %v1320
    %1337 = vrot.lane.b32.xlu0 %v1321, 4
    %v1338 = vpop.permute.xlu0 %1337
    %1339 = vrot.lane.b32.xlu0 %v1322, 4
    %v1340 = vpop.permute.xlu0 %1339
    %1341 = vrot.lane.b32.xlu0 %v1323, 4
    %v1342 = vpop.permute.xlu0 %1341
    %1343 = vrot.lane.b32.xlu0 %v1324, 4
    %v1344 = vpop.permute.xlu0 %1343
    %1345 = vrot.lane.b32.xlu0 %v1325, 4
    %v1346 = vpop.permute.xlu0 %1345
    %1347 = vrot.lane.b32.xlu0 %v1326, 4
    %v1348 = vpop.permute.xlu0 %1347
    %1349 = vrot.lane.b32.xlu0 %v1327, 4
    %v1350 = vpop.permute.xlu0 %1349
    %1351 = vrot.lane.b32.xlu0 %v1328, 4
    %v1352 = vpop.permute.xlu0 %1351
    %1353 = vrot.lane.b32.xlu0 %v1329, 4
    %v1354 = vpop.permute.xlu0 %1353
    %1355 = vrot.lane.b32.xlu0 %v1330, 4
    %v1356 = vpop.permute.xlu0 %1355
    %1357 = vrot.lane.b32.xlu0 %v1331, 4
    %v1358 = vpop.permute.xlu0 %1357
    %1359 = vrot.lane.b32.xlu0 %v1332, 4
    %v1360 = vpop.permute.xlu0 %1359
    %1361 = vrot.lane.b32.xlu0 %v1333, 4
    %v1362 = vpop.permute.xlu0 %1361
    %1363 = vrot.lane.b32.xlu0 %v1334, 4
    %v1364 = vpop.permute.xlu0 %1363
    %1365 = vrot.lane.b32.xlu0 %v1335, 4
    %v1366 = vpop.permute.xlu0 %1365
    %1367 = vrot.lane.b32.xlu0 %v1336, 4
    %v1368 = vpop.permute.xlu0 %1367
    %v1401 = vunpack.c.l.b16 %v1240
    %v1402 = vunpack.c.l.b16 %v1273
    %v1403 = vunpack.c.l.b16 %v1241
    %v1404 = vunpack.c.l.b16 %v1274
    %v1405 = vunpack.c.l.b16 %v1242
    %v1406 = vunpack.c.l.b16 %v1275
    %v1407 = vunpack.c.l.b16 %v1243
    %v1408 = vunpack.c.l.b16 %v1276
    %v1409 = vunpack.c.l.b16 %v1244
    %v1410 = vunpack.c.l.b16 %v1277
    %v1411 = vunpack.c.l.b16 %v1245
    %v1412 = vunpack.c.l.b16 %v1278
    %v1413 = vunpack.c.l.b16 %v1246
    %v1414 = vunpack.c.l.b16 %v1279
    %v1415 = vunpack.c.l.b16 %v1247
    %v1416 = vunpack.c.l.b16 %v1280
    %v1417 = vunpack.c.l.b16 %v1248
    %v1418 = vunpack.c.l.b16 %v1281
    %v1419 = vunpack.c.l.b16 %v1249
    %v1420 = vunpack.c.l.b16 %v1282
    %v1421 = vunpack.c.l.b16 %v1250
    %v1422 = vunpack.c.l.b16 %v1283
    %v1423 = vunpack.c.l.b16 %v1251
    %v1424 = vunpack.c.l.b16 %v1284
    %v1425 = vunpack.c.l.b16 %v1252
    %v1426 = vunpack.c.l.b16 %v1285
    %v1427 = vunpack.c.l.b16 %v1253
    %v1428 = vunpack.c.l.b16 %v1286
    %v1429 = vunpack.c.l.b16 %v1254
    %v1430 = vunpack.c.l.b16 %v1287
    %v1431 = vunpack.c.l.b16 %v1255
    %v1432 = vunpack.c.l.b16 %v1288
    %v1433 = vpack.c.b16 %v1402, %v1401
    %v1434 = vpack.c.b16 %v1404, %v1403
    %v1435 = vpack.c.b16 %v1406, %v1405
    %v1436 = vpack.c.b16 %v1408, %v1407
    %v1437 = vpack.c.b16 %v1410, %v1409
    %v1438 = vpack.c.b16 %v1412, %v1411
    %v1439 = vpack.c.b16 %v1414, %v1413
    %v1440 = vpack.c.b16 %v1416, %v1415
    %v1441 = vpack.c.b16 %v1418, %v1417
    %v1442 = vpack.c.b16 %v1420, %v1419
    %v1443 = vpack.c.b16 %v1422, %v1421
    %v1444 = vpack.c.b16 %v1424, %v1423
    %v1445 = vpack.c.b16 %v1426, %v1425
    %v1446 = vpack.c.b16 %v1428, %v1427
    %v1447 = vpack.c.b16 %v1430, %v1429
    %v1448 = vpack.c.b16 %v1432, %v1431
    %v1450 = vshrl.u32 %v1433, 16
    %v1452 = vshll.u32 %v1433, 16
    %v1454 = vrot.slane %v1452, 1
    %v1455 = vor.u32 %v1450, %v1454
    %v1457 = vshrl.u32 %v1434, 16
    %v1459 = vshll.u32 %v1434, 16
    %v1461 = vrot.slane %v1459, 1
    %v1462 = vor.u32 %v1457, %v1461
    %v1464 = vshrl.u32 %v1435, 16
    %v1466 = vshll.u32 %v1435, 16
    %v1468 = vrot.slane %v1466, 1
    %v1469 = vor.u32 %v1464, %v1468
    %v1471 = vshrl.u32 %v1436, 16
    %v1473 = vshll.u32 %v1436, 16
    %v1475 = vrot.slane %v1473, 1
    %v1476 = vor.u32 %v1471, %v1475
    %v1478 = vshrl.u32 %v1437, 16
    %v1480 = vshll.u32 %v1437, 16
    %v1482 = vrot.slane %v1480, 1
    %v1483 = vor.u32 %v1478, %v1482
    %v1485 = vshrl.u32 %v1438, 16
    %v1487 = vshll.u32 %v1438, 16
    %v1489 = vrot.slane %v1487, 1
    %v1490 = vor.u32 %v1485, %v1489
    %v1492 = vshrl.u32 %v1439, 16
    %v1494 = vshll.u32 %v1439, 16
    %v1496 = vrot.slane %v1494, 1
    %v1497 = vor.u32 %v1492, %v1496
    %v1499 = vshrl.u32 %v1440, 16
    %v1501 = vshll.u32 %v1440, 16
    %v1503 = vrot.slane %v1501, 1
    %v1504 = vor.u32 %v1499, %v1503
    %v1506 = vshrl.u32 %v1441, 16
    %v1508 = vshll.u32 %v1441, 16
    %v1510 = vrot.slane %v1508, 1
    %v1511 = vor.u32 %v1506, %v1510
    %v1513 = vshrl.u32 %v1442, 16
    %v1515 = vshll.u32 %v1442, 16
    %v1517 = vrot.slane %v1515, 1
    %v1518 = vor.u32 %v1513, %v1517
    %v1520 = vshrl.u32 %v1443, 16
    %v1522 = vshll.u32 %v1443, 16
    %v1524 = vrot.slane %v1522, 1
    %v1525 = vor.u32 %v1520, %v1524
    %v1527 = vshrl.u32 %v1444, 16
    %v1529 = vshll.u32 %v1444, 16
    %v1531 = vrot.slane %v1529, 1
    %v1532 = vor.u32 %v1527, %v1531
    %v1534 = vshrl.u32 %v1445, 16
    %v1536 = vshll.u32 %v1445, 16
    %v1538 = vrot.slane %v1536, 1
    %v1539 = vor.u32 %v1534, %v1538
    %v1541 = vshrl.u32 %v1446, 16
    %v1543 = vshll.u32 %v1446, 16
    %v1545 = vrot.slane %v1543, 1
    %v1546 = vor.u32 %v1541, %v1545
    %v1548 = vshrl.u32 %v1447, 16
    %v1550 = vshll.u32 %v1447, 16
    %v1552 = vrot.slane %v1550, 1
    %v1553 = vor.u32 %v1548, %v1552
    %v1555 = vshrl.u32 %v1448, 16
    %v1557 = vshll.u32 %v1448, 16
    %v1559 = vrot.slane %v1557, 1
    %v1560 = vor.u32 %v1555, %v1559
    %1561 = vrot.lane.b32.xlu0 %v1455, 8
    %v1562 = vpop.permute.xlu0 %1561
    %1563 = vrot.lane.b32.xlu0 %v1462, 8
    %v1564 = vpop.permute.xlu0 %1563
    %1565 = vrot.lane.b32.xlu0 %v1469, 8
    %v1566 = vpop.permute.xlu0 %1565
    %1567 = vrot.lane.b32.xlu0 %v1476, 8
    %v1568 = vpop.permute.xlu0 %1567
    %1569 = vrot.lane.b32.xlu0 %v1483, 8
    %v1570 = vpop.permute.xlu0 %1569
    %1571 = vrot.lane.b32.xlu0 %v1490, 8
    %v1572 = vpop.permute.xlu0 %1571
    %1573 = vrot.lane.b32.xlu0 %v1497, 8
    %v1574 = vpop.permute.xlu0 %1573
    %1575 = vrot.lane.b32.xlu0 %v1504, 8
    %v1576 = vpop.permute.xlu0 %1575
    %1577 = vrot.lane.b32.xlu0 %v1511, 8
    %v1578 = vpop.permute.xlu0 %1577
    %1579 = vrot.lane.b32.xlu0 %v1518, 8
    %v1580 = vpop.permute.xlu0 %1579
    %1581 = vrot.lane.b32.xlu0 %v1525, 8
    %v1582 = vpop.permute.xlu0 %1581
    %1583 = vrot.lane.b32.xlu0 %v1532, 8
    %v1584 = vpop.permute.xlu0 %1583
    %1585 = vrot.lane.b32.xlu0 %v1539, 8
    %v1586 = vpop.permute.xlu0 %1585
    %1587 = vrot.lane.b32.xlu0 %v1546, 8
    %v1588 = vpop.permute.xlu0 %1587
    %1589 = vrot.lane.b32.xlu0 %v1553, 8
    %v1590 = vpop.permute.xlu0 %1589
    %1591 = vrot.lane.b32.xlu0 %v1560, 8
    %v1592 = vpop.permute.xlu0 %1591
    %v1595 = vsel %vm378, %v1240, %v1338
    %v1598 = vsel %vm378, %v1241, %v1340
    %v1601 = vsel %vm378, %v1242, %v1342
    %v1604 = vsel %vm378, %v1243, %v1344
    %v1607 = vsel %vm378, %v1244, %v1346
    %v1610 = vsel %vm378, %v1245, %v1348
    %v1613 = vsel %vm378, %v1246, %v1350
    %v1616 = vsel %vm378, %v1247, %v1352
    %v1619 = vsel %vm378, %v1248, %v1354
    %v1622 = vsel %vm378, %v1249, %v1356
    %v1625 = vsel %vm378, %v1250, %v1358
    %v1628 = vsel %vm378, %v1251, %v1360
    %v1631 = vsel %vm378, %v1252, %v1362
    %v1634 = vsel %vm378, %v1253, %v1364
    %v1637 = vsel %vm378, %v1254, %v1366
    %v1640 = vsel %vm378, %v1255, %v1368
    %v1642 = vsel %vm427, %v1595, %v1562
    %v1644 = vsel %vm427, %v1598, %v1564
    %v1646 = vsel %vm427, %v1601, %v1566
    %v1648 = vsel %vm427, %v1604, %v1568
    %v1650 = vsel %vm427, %v1607, %v1570
    %v1652 = vsel %vm427, %v1610, %v1572
    %v1654 = vsel %vm427, %v1613, %v1574
    %v1656 = vsel %vm427, %v1616, %v1576
    %v1658 = vsel %vm427, %v1619, %v1578
    %v1660 = vsel %vm427, %v1622, %v1580
    %v1662 = vsel %vm427, %v1625, %v1582
    %v1664 = vsel %vm427, %v1628, %v1584
    %v1666 = vsel %vm427, %v1631, %v1586
    %v1668 = vsel %vm427, %v1634, %v1588
    %v1670 = vsel %vm427, %v1637, %v1590
    %v1672 = vsel %vm427, %v1640, %v1592
    %s1673 = scalar_lea.vmem %s1, 16
    %v1674 = vld [vmem:[%s1673] sm:$0xf]
    %v1675 = vld [vmem:[%s1673 + $0x4] sm:$0x3]
    %v1692 = vunpack.c.l.b16 %v1642
    %v1693 = vunpack.c.l.b16 %v1644
    %v1694 = vunpack.c.l.b16 %v1646
    %v1695 = vunpack.c.l.b16 %v1648
    %v1696 = vunpack.c.l.b16 %v1650
    %v1697 = vunpack.c.l.b16 %v1652
    %v1698 = vunpack.c.l.b16 %v1654
    %v1699 = vunpack.c.l.b16 %v1656
    %v1700 = vunpack.c.l.b16 %v1658
    %v1701 = vunpack.c.l.b16 %v1660
    %v1702 = vunpack.c.l.b16 %v1662
    %v1703 = vunpack.c.l.b16 %v1664
    %v1704 = vunpack.c.l.b16 %v1666
    %v1705 = vunpack.c.l.b16 %v1668
    %v1706 = vunpack.c.l.b16 %v1670
    %v1707 = vunpack.c.l.b16 %v1672
    %v1708 = vpack.c.b16 %v1693, %v1692
    %v1709 = vpack.c.b16 %v1695, %v1694
    %v1710 = vpack.c.b16 %v1697, %v1696
    %v1711 = vpack.c.b16 %v1699, %v1698
    %v1712 = vpack.c.b16 %v1701, %v1700
    %v1713 = vpack.c.b16 %v1703, %v1702
    %v1714 = vpack.c.b16 %v1705, %v1704
    %v1715 = vpack.c.b16 %v1707, %v1706
    %v1718 = vunpack.c.l.b16 %v1674
    %v1719 = vunpack.c.l.b16 %v1675
    %v1720 = vpack.c.b16 %v1719, %v1718
    %v1722 = vsel %vm944, %v1708, 0
    %v1725 = vsel %vm944, %v1709, 0
    %v1728 = vsel %vm944, %v1710, 0
    %v1731 = vsel %vm944, %v1711, 0
    %v1734 = vsel %vm944, %v1712, 0
    %v1737 = vsel %vm944, %v1713, 0
    %v1740 = vsel %vm944, %v1714, 0
    %v1743 = vsel %vm944, %v1715, 0
    %v1746 = vsel %vm969, %v1720, 0
    %1748 = vmatprep.subr.bf16.mxu0 0
    %1749 = vmatpush1.bf16.msra.mxu0 %v1746
    %1750 = vmatprep.subr.bf16.mxu0 0
    %1751 = vmatpush1.bf16.msra.mxu0 0
    %1752 = vmatprep.subr.bf16.mxu0 0
    %1753 = vmatpush1.bf16.msra.mxu0 0
    %1754 = vmatprep.subr.bf16.mxu0 0
    %1755 = vmatpush1.bf16.msra.mxu0 0
    %1756 = vmatprep.subr.bf16.mxu0 0
    %1757 = vmatpush1.bf16.msra.mxu0 0
    %1758 = vmatprep.subr.bf16.mxu0 0
    %1759 = vmatpush1.bf16.msra.mxu0 0
    %1760 = vmatprep.subr.bf16.mxu0 0
    %1761 = vmatpush1.bf16.msra.mxu0 0
    %1762 = vmatprep.subr.bf16.mxu0 0
    %1763 = vmatpush1.bf16.msra.mxu0 0
    %1764 = vmatprep.subr.bf16.mxu0 0
    %1765 = vmatpush1.bf16.msra.mxu0 0
    %1766 = vmatprep.subr.bf16.mxu0 0
    %1767 = vmatpush1.bf16.msra.mxu0 0
    %1768 = vmatprep.subr.bf16.mxu0 0
    %1769 = vmatpush1.bf16.msra.mxu0 0
    %1770 = vmatprep.subr.bf16.mxu0 0
    %1771 = vmatpush1.bf16.msra.mxu0 0
    %1772 = vmatprep.subr.bf16.mxu0 0
    %1773 = vmatpush1.bf16.msra.mxu0 0
    %1774 = vmatprep.subr.bf16.mxu0 0
    %1775 = vmatpush1.bf16.msra.mxu0 0
    %1776 = vmatprep.subr.bf16.mxu0 0
    %1777 = vmatpush1.bf16.msra.mxu0 0
    %1778 = vmatprep.subr.bf16.mxu0 0
    %1779 = vmatpush1.bf16.msra.mxu0 0
    %1780 = vmatprep.mubr.bf16.mxu0 0
    %1781 = vmatmul.mubr.bf16.gmra.mrb[0].mxu0 %v1722
    %v1782 = vpop.f32.mrb[0].mxu0
    %v1783 = vadd.f32 0.0, %v1782
    %v1784 = vpop.f32.mrb[0].mxu0
    %v1785 = vpop.f32.mrb[0].mxu0
    %v1786 = vadd.f32 0.0, %v1785
    %v1787 = vpop.f32.mrb[0].mxu0
    %1788 = vmatprep.mubr.bf16.mxu0 0
    %1789 = vmatmul.mubr.bf16.gmra.mrb[0].mxu0 %v1725
    %v1790 = vpop.f32.mrb[0].mxu0
    %v1791 = vadd.f32 0.0, %v1790
    %v1792 = vpop.f32.mrb[0].mxu0
    %v1793 = vpop.f32.mrb[0].mxu0
    %v1794 = vadd.f32 0.0, %v1793
    %v1795 = vpop.f32.mrb[0].mxu0
    %1796 = vmatprep.mubr.bf16.mxu0 0
    %1797 = vmatmul.mubr.bf16.gmra.mrb[0].mxu0 %v1728
    %v1798 = vpop.f32.mrb[0].mxu0
    %v1799 = vadd.f32 0.0, %v1798
    %v1800 = vpop.f32.mrb[0].mxu0
    %v1801 = vpop.f32.mrb[0].mxu0
    %v1802 = vadd.f32 0.0, %v1801
    %v1803 = vpop.f32.mrb[0].mxu0
    %1804 = vmatprep.mubr.bf16.mxu0 0
    %1805 = vmatmul.mubr.bf16.gmra.mrb[0].mxu0 %v1731
    %v1806 = vpop.f32.mrb[0].mxu0
    %v1807 = vadd.f32 0.0, %v1806
    %v1808 = vpop.f32.mrb[0].mxu0
    %v1809 = vpop.f32.mrb[0].mxu0
    %v1810 = vadd.f32 0.0, %v1809
    %v1811 = vpop.f32.mrb[0].mxu0
    %1812 = vmatprep.mubr.bf16.mxu0 0
    %1813 = vmatmul.mubr.bf16.gmra.mrb[0].mxu0 %v1734
    %v1814 = vpop.f32.mrb[0].mxu0
    %v1815 = vadd.f32 0.0, %v1814
    %v1816 = vpop.f32.mrb[0].mxu0
    %v1817 = vpop.f32.mrb[0].mxu0
    %v1818 = vadd.f32 0.0, %v1817
    %v1819 = vpop.f32.mrb[0].mxu0
    %1820 = vmatprep.mubr.bf16.mxu0 0
    %1821 = vmatmul.mubr.bf16.gmra.mrb[0].mxu0 %v1737
    %v1822 = vpop.f32.mrb[0].mxu0
    %v1823 = vadd.f32 0.0, %v1822
    %v1824 = vpop.f32.mrb[0].mxu0
    %v1825 = vpop.f32.mrb[0].mxu0
    %v1826 = vadd.f32 0.0, %v1825
    %v1827 = vpop.f32.mrb[0].mxu0
    %1828 = vmatprep.mubr.bf16.mxu0 0
    %1829 = vmatmul.mubr.bf16.gmra.mrb[0].mxu0 %v1740
    %v1830 = vpop.f32.mrb[0].mxu0
    %v1831 = vadd.f32 0.0, %v1830
    %v1832 = vpop.f32.mrb[0].mxu0
    %v1833 = vpop.f32.mrb[0].mxu0
    %v1834 = vadd.f32 0.0, %v1833
    %v1835 = vpop.f32.mrb[0].mxu0
    %1836 = vmatprep.mubr.bf16.mxu0 0
    %1837 = vmatmul.mubr.bf16.gmra.mrb[0].mxu0 %v1743
    %v1838 = vpop.f32.mrb[0].mxu0
    %v1839 = vadd.f32 0.0, %v1838
    %v1840 = vpop.f32.mrb[0].mxu0
    %v1841 = vpop.f32.mrb[0].mxu0
    %v1842 = vadd.f32 0.0, %v1841
    %v1843 = vpop.f32.mrb[0].mxu0
    %1844 = vdwg.mxu0
    %v1845 = vadd.f32 %v1177, %v1783
    %v1846 = vadd.f32 %v1180, %v1786
    %v1847 = vadd.f32 %v1185, %v1791
    %v1848 = vadd.f32 %v1188, %v1794
    %v1849 = vadd.f32 %v1193, %v1799
    %v1850 = vadd.f32 %v1196, %v1802
    %v1851 = vadd.f32 %v1201, %v1807
    %v1852 = vadd.f32 %v1204, %v1810
    %v1853 = vadd.f32 %v1209, %v1815
    %v1854 = vadd.f32 %v1212, %v1818
    %v1855 = vadd.f32 %v1217, %v1823
    %v1856 = vadd.f32 %v1220, %v1826
    %v1857 = vadd.f32 %v1225, %v1831
    %v1858 = vadd.f32 %v1228, %v1834
    %v1859 = vadd.f32 %v1233, %v1839
    %v1860 = vadd.f32 %v1236, %v1842
    %v1861 = vld [vmem:[%s2] sm:$0x3]
    %v1862 = vpack.c.b16 %v529, %v528
    %v1863 = vpack.c.b16 %v531, %v530
    %v1864 = vpack.c.b16 %v533, %v532
    %v1865 = vpack.c.b16 %v535, %v534
    %v1866 = vpack.c.b16 %v537, %v536
    %v1867 = vpack.c.b16 %v539, %v538
    %v1868 = vpack.c.b16 %v541, %v540
    %v1869 = vpack.c.b16 %v543, %v542
    %v1871 = vsel %vm378, %v1862, 0
    %v1874 = vsel %vm378, %v1863, 0
    %v1877 = vsel %vm378, %v1864, 0
    %v1880 = vsel %vm378, %v1865, 0
    %v1883 = vsel %vm378, %v1866, 0
    %v1886 = vsel %vm378, %v1867, 0
    %v1889 = vsel %vm378, %v1868, 0
    %v1892 = vsel %vm378, %v1869, 0
    %vm1894 = vcmask 1041408
    %v1896 = vsel %vm1894, %v1861, 0
    %1898 = vmatprep.subr.bf16.mxu0 0
    %1899 = vmatpush1.bf16.msra.mxu0 %v1896
    %1900 = vmatprep.subr.bf16.mxu0 0
    %1901 = vmatpush1.bf16.msra.mxu0 0
    %1902 = vmatprep.subr.bf16.mxu0 0
    %1903 = vmatpush1.bf16.msra.mxu0 0
    %1904 = vmatprep.subr.bf16.mxu0 0
    %1905 = vmatpush1.bf16.msra.mxu0 0
    %1906 = vmatprep.subr.bf16.mxu0 0
    %1907 = vmatpush1.bf16.msra.mxu0 0
    %1908 = vmatprep.subr.bf16.mxu0 0
    %1909 = vmatpush1.bf16.msra.mxu0 0
    %1910 = vmatprep.subr.bf16.mxu0 0
    %1911 = vmatpush1.bf16.msra.mxu0 0
    %1912 = vmatprep.subr.bf16.mxu0 0
    %1913 = vmatpush1.bf16.msra.mxu0 0
    %1914 = vmatprep.subr.bf16.mxu0 0
    %1915 = vmatpush1.bf16.msra.mxu0 0
    %1916 = vmatprep.subr.bf16.mxu0 0
    %1917 = vmatpush1.bf16.msra.mxu0 0
    %1918 = vmatprep.subr.bf16.mxu0 0
    %1919 = vmatpush1.bf16.msra.mxu0 0
    %1920 = vmatprep.subr.bf16.mxu0 0
    %1921 = vmatpush1.bf16.msra.mxu0 0
    %1922 = vmatprep.subr.bf16.mxu0 0
    %1923 = vmatpush1.bf16.msra.mxu0 0
    %1924 = vmatprep.subr.bf16.mxu0 0
    %1925 = vmatpush1.bf16.msra.mxu0 0
    %1926 = vmatprep.subr.bf16.mxu0 0
    %1927 = vmatpush1.bf16.msra.mxu0 0
    %1928 = vmatprep.subr.bf16.mxu0 0
    %1929 = vmatpush1.bf16.msra.mxu0 0
    %1930 = vmatprep.mubr.bf16.mxu0 0
    %1931 = vmatmul.mubr.bf16.gmra.mrb[0].mxu0 %v1871
    %v1932 = vpop.f32.mrb[0].mxu0
    %v1933 = vadd.f32 0.0, %v1932
    %v1934 = vpop.f32.mrb[0].mxu0
    %v1935 = vpop.f32.mrb[0].mxu0
    %v1936 = vadd.f32 0.0, %v1935
    %v1937 = vpop.f32.mrb[0].mxu0
    %1938 = vmatprep.mubr.bf16.mxu0 0
    %1939 = vmatmul.mubr.bf16.gmra.mrb[0].mxu0 %v1874
    %v1940 = vpop.f32.mrb[0].mxu0
    %v1941 = vadd.f32 0.0, %v1940
    %v1942 = vpop.f32.mrb[0].mxu0
    %v1943 = vpop.f32.mrb[0].mxu0
    %v1944 = vadd.f32 0.0, %v1943
    %v1945 = vpop.f32.mrb[0].mxu0
    %1946 = vmatprep.mubr.bf16.mxu0 0
    %1947 = vmatmul.mubr.bf16.gmra.mrb[0].mxu0 %v1877
    %v1948 = vpop.f32.mrb[0].mxu0
    %v1949 = vadd.f32 0.0, %v1948
    %v1950 = vpop.f32.mrb[0].mxu0
    %v1951 = vpop.f32.mrb[0].mxu0
    %v1952 = vadd.f32 0.0, %v1951
    %v1953 = vpop.f32.mrb[0].mxu0
    %1954 = vmatprep.mubr.bf16.mxu0 0
    %1955 = vmatmul.mubr.bf16.gmra.mrb[0].mxu0 %v1880
    %v1956 = vpop.f32.mrb[0].mxu0
    %v1957 = vadd.f32 0.0, %v1956
    %v1958 = vpop.f32.mrb[0].mxu0
    %v1959 = vpop.f32.mrb[0].mxu0
    %v1960 = vadd.f32 0.0, %v1959
    %v1961 = vpop.f32.mrb[0].mxu0
    %1962 = vmatprep.mubr.bf16.mxu0 0
    %1963 = vmatmul.mubr.bf16.gmra.mrb[0].mxu0 %v1883
    %v1964 = vpop.f32.mrb[0].mxu0
    %v1965 = vadd.f32 0.0, %v1964
    %v1966 = vpop.f32.mrb[0].mxu0
    %v1967 = vpop.f32.mrb[0].mxu0
    %v1968 = vadd.f32 0.0, %v1967
    %v1969 = vpop.f32.mrb[0].mxu0
    %1970 = vmatprep.mubr.bf16.mxu0 0
    %1971 = vmatmul.mubr.bf16.gmra.mrb[0].mxu0 %v1886
    %v1972 = vpop.f32.mrb[0].mxu0
    %v1973 = vadd.f32 0.0, %v1972
    %v1974 = vpop.f32.mrb[0].mxu0
    %v1975 = vpop.f32.mrb[0].mxu0
    %v1976 = vadd.f32 0.0, %v1975
    %v1977 = vpop.f32.mrb[0].mxu0
    %1978 = vmatprep.mubr.bf16.mxu0 0
    %1979 = vmatmul.mubr.bf16.gmra.mrb[0].mxu0 %v1889
    %v1980 = vpop.f32.mrb[0].mxu0
    %v1981 = vadd.f32 0.0, %v1980
    %v1982 = vpop.f32.mrb[0].mxu0
    %v1983 = vpop.f32.mrb[0].mxu0
    %v1984 = vadd.f32 0.0, %v1983
    %v1985 = vpop.f32.mrb[0].mxu0
    %1986 = vmatprep.mubr.bf16.mxu0 0
    %1987 = vmatmul.mubr.bf16.gmra.mrb[0].mxu0 %v1892
    %v1988 = vpop.f32.mrb[0].mxu0
    %v1989 = vadd.f32 0.0, %v1988
    %v1990 = vpop.f32.mrb[0].mxu0
    %v1991 = vpop.f32.mrb[0].mxu0
    %v1992 = vadd.f32 0.0, %v1991
    %v1993 = vpop.f32.mrb[0].mxu0
    %1994 = vdwg.mxu0
    %v1995 = vpack.c.bf16 %v1845, %v1845
    %v1996 = vpack.c.bf16 %v1846, %v1846
    %v1997 = vpack.c.bf16 %v1847, %v1847
    %v1998 = vpack.c.bf16 %v1848, %v1848
    %v1999 = vpack.c.bf16 %v1849, %v1849
    %v2000 = vpack.c.bf16 %v1850, %v1850
    %v2001 = vpack.c.bf16 %v1851, %v1851
    %v2002 = vpack.c.bf16 %v1852, %v1852
    %v2003 = vpack.c.bf16 %v1853, %v1853
    %v2004 = vpack.c.bf16 %v1854, %v1854
    %v2005 = vpack.c.bf16 %v1855, %v1855
    %v2006 = vpack.c.bf16 %v1856, %v1856
    %v2007 = vpack.c.bf16 %v1857, %v1857
    %v2008 = vpack.c.bf16 %v1858, %v1858
    %v2009 = vpack.c.bf16 %v1859, %v1859
    %v2010 = vpack.c.bf16 %v1860, %v1860
    %vm2011 = vcmask 60416
    %2012 = vst.msk [vmem:[#allocation2] sm:$0xf] %vm2011, %v1995
    %2013 = vst.msk [vmem:[#allocation2 + $0x4] sm:$0xf] %vm2011, %v1996
    %2014 = vst.msk [vmem:[#allocation2 + $0x8] sm:$0xf] %vm2011, %v1997
    %2015 = vst.msk [vmem:[#allocation2 + $0xc] sm:$0xf] %vm2011, %v1998
    %2016 = vst.msk [vmem:[#allocation2 + $0x10] sm:$0xf] %vm2011, %v1999
    %2017 = vst.msk [vmem:[#allocation2 + $0x14] sm:$0xf] %vm2011, %v2000
    %2018 = vst.msk [vmem:[#allocation2 + $0x18] sm:$0xf] %vm2011, %v2001
    %2019 = vst.msk [vmem:[#allocation2 + $0x1c] sm:$0xf] %vm2011, %v2002
    %2020 = vst.msk [vmem:[#allocation2 + $0x20] sm:$0xf] %vm2011, %v2003
    %2021 = vst.msk [vmem:[#allocation2 + $0x24] sm:$0xf] %vm2011, %v2004
    %2022 = vst.msk [vmem:[#allocation2 + $0x28] sm:$0xf] %vm2011, %v2005
    %2023 = vst.msk [vmem:[#allocation2 + $0x2c] sm:$0xf] %vm2011, %v2006
    %2024 = vst.msk [vmem:[#allocation2 + $0x30] sm:$0xf] %vm2011, %v2007
    %2025 = vst.msk [vmem:[#allocation2 + $0x34] sm:$0xf] %vm2011, %v2008
    %2026 = vst.msk [vmem:[#allocation2 + $0x38] sm:$0xf] %vm2011, %v2009
    %2027 = vst.msk [vmem:[#allocation2 + $0x3c] sm:$0xf] %vm2011, %v2010
    %v2028 = vpack.c.bf16 %v1933, %v1933
    %v2029 = vpack.c.bf16 %v1936, %v1936
    %v2030 = vpack.c.bf16 %v1941, %v1941
    %v2031 = vpack.c.bf16 %v1944, %v1944
    %v2032 = vpack.c.bf16 %v1949, %v1949
    %v2033 = vpack.c.bf16 %v1952, %v1952
    %v2034 = vpack.c.bf16 %v1957, %v1957
    %v2035 = vpack.c.bf16 %v1960, %v1960
    %v2036 = vpack.c.bf16 %v1965, %v1965
    %v2037 = vpack.c.bf16 %v1968, %v1968
    %v2038 = vpack.c.bf16 %v1973, %v1973
    %v2039 = vpack.c.bf16 %v1976, %v1976
    %v2040 = vpack.c.bf16 %v1981, %v1981
    %v2041 = vpack.c.bf16 %v1984, %v1984
    %v2042 = vpack.c.bf16 %v1989, %v1989
    %v2043 = vpack.c.bf16 %v1992, %v1992
    %2044 = vst.msk [vmem:[#allocation4] sm:$0xf] %vm2011, %v2028
    %2045 = vst.msk [vmem:[#allocation4 + $0x4] sm:$0xf] %vm2011, %v2029
    %2046 = vst.msk [vmem:[#allocation4 + $0x8] sm:$0xf] %vm2011, %v2030
    %2047 = vst.msk [vmem:[#allocation4 + $0xc] sm:$0xf] %vm2011, %v2031
    %2048 = vst.msk [vmem:[#allocation4 + $0x10] sm:$0xf] %vm2011, %v2032
    %2049 = vst.msk [vmem:[#allocation4 + $0x14] sm:$0xf] %vm2011, %v2033
    %2050 = vst.msk [vmem:[#allocation4 + $0x18] sm:$0xf] %vm2011, %v2034
    %2051 = vst.msk [vmem:[#allocation4 + $0x1c] sm:$0xf] %vm2011, %v2035
    %2052 = vst.msk [vmem:[#allocation4 + $0x20] sm:$0xf] %vm2011, %v2036
    %2053 = vst.msk [vmem:[#allocation4 + $0x24] sm:$0xf] %vm2011, %v2037
    %2054 = vst.msk [vmem:[#allocation4 + $0x28] sm:$0xf] %vm2011, %v2038
    %2055 = vst.msk [vmem:[#allocation4 + $0x2c] sm:$0xf] %vm2011, %v2039
    %2056 = vst.msk [vmem:[#allocation4 + $0x30] sm:$0xf] %vm2011, %v2040
    %2057 = vst.msk [vmem:[#allocation4 + $0x34] sm:$0xf] %vm2011, %v2041
    %2058 = vst.msk [vmem:[#allocation4 + $0x38] sm:$0xf] %vm2011, %v2042
    %2059 = vst.msk [vmem:[#allocation4 + $0x3c] sm:$0xf] %vm2011, %v2043
    %v2060 = vsel %vm427, %v1845, 0.0
    %v2061 = vsel %vm427, %v1846, 0.0
    %v2062 = vadd.f32 %v2060, %v2061
    %v2063 = vsel %vm427, %v1847, 0.0
    %v2064 = vadd.f32 %v2062, %v2063
    %v2065 = vsel %vm427, %v1848, 0.0
    %v2066 = vadd.f32 %v2064, %v2065
    %v2067 = vsel %vm427, %v1849, 0.0
    %v2068 = vadd.f32 %v2066, %v2067
    %v2069 = vsel %vm427, %v1850, 0.0
    %v2070 = vadd.f32 %v2068, %v2069
    %v2071 = vsel %vm427, %v1851, 0.0
    %v2072 = vadd.f32 %v2070, %v2071
    %v2073 = vsel %vm427, %v1852, 0.0
    %v2074 = vadd.f32 %v2072, %v2073
    %v2075 = vsel %vm427, %v1853, 0.0
    %v2076 = vadd.f32 %v2074, %v2075
    %v2077 = vsel %vm427, %v1854, 0.0
    %v2078 = vadd.f32 %v2076, %v2077
    %v2079 = vsel %vm427, %v1855, 0.0
    %v2080 = vadd.f32 %v2078, %v2079
    %v2081 = vsel %vm427, %v1856, 0.0
    %v2082 = vadd.f32 %v2080, %v2081
    %v2083 = vsel %vm427, %v1857, 0.0
    %v2084 = vadd.f32 %v2082, %v2083
    %v2085 = vsel %vm427, %v1858, 0.0
    %v2086 = vadd.f32 %v2084, %v2085
    %v2087 = vsel %vm427, %v1859, 0.0
    %v2088 = vadd.f32 %v2086, %v2087
    %v2089 = vsel %vm427, %v1860, 0.0
    %v2090 = vadd.f32 %v2088, %v2089
    %v2091 = vrot.slane %v2090, 4
    %v2092 = vadd.f32 %v2090, %v2091
    %v2093 = vrot.slane %v2092, 2
    %v2094 = vadd.f32 %v2092, %v2093
    %v2095 = vrot.slane %v2094, 1
    %v2096 = vadd.f32 %v2094, %v2095
    %vm2097 = vcmask 57344
    %2098 = vst.msk [vmem:[#allocation6] sm:$0x1] %vm2097, %v2096
    %v2099 = vmul.f32 %v1845, %v1845
    %v2100 = vmul.f32 %v1846, %v1846
    %v2101 = vmul.f32 %v1847, %v1847
    %v2102 = vmul.f32 %v1848, %v1848
    %v2103 = vmul.f32 %v1849, %v1849
    %v2104 = vmul.f32 %v1850, %v1850
    %v2105 = vmul.f32 %v1851, %v1851
    %v2106 = vmul.f32 %v1852, %v1852
    %v2107 = vmul.f32 %v1853, %v1853
    %v2108 = vmul.f32 %v1854, %v1854
    %v2109 = vmul.f32 %v1855, %v1855
    %v2110 = vmul.f32 %v1856, %v1856
    %v2111 = vmul.f32 %v1857, %v1857
    %v2112 = vmul.f32 %v1858, %v1858
    %v2113 = vmul.f32 %v1859, %v1859
    %v2114 = vmul.f32 %v1860, %v1860
    %v2115 = vsel %vm427, %v2099, 0.0
    %v2116 = vsel %vm427, %v2100, 0.0
    %v2117 = vadd.f32 %v2115, %v2116
    %v2118 = vsel %vm427, %v2101, 0.0
    %v2119 = vadd.f32 %v2117, %v2118
    %v2120 = vsel %vm427, %v2102, 0.0
    %v2121 = vadd.f32 %v2119, %v2120
    %v2122 = vsel %vm427, %v2103, 0.0
    %v2123 = vadd.f32 %v2121, %v2122
    %v2124 = vsel %vm427, %v2104, 0.0
    %v2125 = vadd.f32 %v2123, %v2124
    %v2126 = vsel %vm427, %v2105, 0.0
    %v2127 = vadd.f32 %v2125, %v2126
    %v2128 = vsel %vm427, %v2106, 0.0
    %v2129 = vadd.f32 %v2127, %v2128
    %v2130 = vsel %vm427, %v2107, 0.0
    %v2131 = vadd.f32 %v2129, %v2130
    %v2132 = vsel %vm427, %v2108, 0.0
    %v2133 = vadd.f32 %v2131, %v2132
    %v2134 = vsel %vm427, %v2109, 0.0
    %v2135 = vadd.f32 %v2133, %v2134
    %v2136 = vsel %vm427, %v2110, 0.0
    %v2137 = vadd.f32 %v2135, %v2136
    %v2138 = vsel %vm427, %v2111, 0.0
    %v2139 = vadd.f32 %v2137, %v2138
    %v2140 = vsel %vm427, %v2112, 0.0
    %v2141 = vadd.f32 %v2139, %v2140
    %v2142 = vsel %vm427, %v2113, 0.0
    %v2143 = vadd.f32 %v2141, %v2142
    %v2144 = vsel %vm427, %v2114, 0.0
    %v2145 = vadd.f32 %v2143, %v2144
    %v2146 = vrot.slane %v2145, 4
    %v2147 = vadd.f32 %v2145, %v2146
    %v2148 = vrot.slane %v2147, 2
    %v2149 = vadd.f32 %v2147, %v2148
    %v2150 = vrot.slane %v2149, 1
    %v2151 = vadd.f32 %v2149, %v2150
    %2152 = vst.msk [vmem:[#allocation7] sm:$0x1] %vm2097, %v2151
    %v2153 = vsel %vm427, %v1933, 0.0
    %v2154 = vsel %vm427, %v1936, 0.0
    %v2155 = vadd.f32 %v2153, %v2154
    %v2156 = vsel %vm427, %v1941, 0.0
    %v2157 = vadd.f32 %v2155, %v2156
    %v2158 = vsel %vm427, %v1944, 0.0
    %v2159 = vadd.f32 %v2157, %v2158
    %v2160 = vsel %vm427, %v1949, 0.0
    %v2161 = vadd.f32 %v2159, %v2160
    %v2162 = vsel %vm427, %v1952, 0.0
    %v2163 = vadd.f32 %v2161, %v2162
    %v2164 = vsel %vm427, %v1957, 0.0
    %v2165 = vadd.f32 %v2163, %v2164
    %v2166 = vsel %vm427, %v1960, 0.0
    %v2167 = vadd.f32 %v2165, %v2166
    %v2168 = vsel %vm427, %v1965, 0.0
    %v2169 = vadd.f32 %v2167, %v2168
    %v2170 = vsel %vm427, %v1968, 0.0
    %v2171 = vadd.f32 %v2169, %v2170
    %v2172 = vsel %vm427, %v1973, 0.0
    %v2173 = vadd.f32 %v2171, %v2172
    %v2174 = vsel %vm427, %v1976, 0.0
    %v2175 = vadd.f32 %v2173, %v2174
    %v2176 = vsel %vm427, %v1981, 0.0
    %v2177 = vadd.f32 %v2175, %v2176
    %v2178 = vsel %vm427, %v1984, 0.0
    %v2179 = vadd.f32 %v2177, %v2178
    %v2180 = vsel %vm427, %v1989, 0.0
    %v2181 = vadd.f32 %v2179, %v2180
    %v2182 = vsel %vm427, %v1992, 0.0
    %v2183 = vadd.f32 %v2181, %v2182
    %v2184 = vrot.slane %v2183, 4
    %v2185 = vadd.f32 %v2183, %v2184
    %v2186 = vrot.slane %v2185, 2
    %v2187 = vadd.f32 %v2185, %v2186
    %v2188 = vrot.slane %v2187, 1
    %v2189 = vadd.f32 %v2187, %v2188
    %2190 = vst.msk [vmem:[#allocation9] sm:$0x1] %vm2097, %v2189
    %v2191 = vmul.f32 %v1933, %v1933
    %v2192 = vmul.f32 %v1936, %v1936
    %v2193 = vmul.f32 %v1941, %v1941
    %v2194 = vmul.f32 %v1944, %v1944
    %v2195 = vmul.f32 %v1949, %v1949
    %v2196 = vmul.f32 %v1952, %v1952
    %v2197 = vmul.f32 %v1957, %v1957
    %v2198 = vmul.f32 %v1960, %v1960
    %v2199 = vmul.f32 %v1965, %v1965
    %v2200 = vmul.f32 %v1968, %v1968
    %v2201 = vmul.f32 %v1973, %v1973
    %v2202 = vmul.f32 %v1976, %v1976
    %v2203 = vmul.f32 %v1981, %v1981
    %v2204 = vmul.f32 %v1984, %v1984
    %v2205 = vmul.f32 %v1989, %v1989
    %v2206 = vmul.f32 %v1992, %v1992
    %v2207 = vsel %vm427, %v2191, 0.0
    %v2208 = vsel %vm427, %v2192, 0.0
    %v2209 = vadd.f32 %v2207, %v2208
    %v2210 = vsel %vm427, %v2193, 0.0
    %v2211 = vadd.f32 %v2209, %v2210
    %v2212 = vsel %vm427, %v2194, 0.0
    %v2213 = vadd.f32 %v2211, %v2212
    %v2214 = vsel %vm427, %v2195, 0.0
    %v2215 = vadd.f32 %v2213, %v2214
    %v2216 = vsel %vm427, %v2196, 0.0
    %v2217 = vadd.f32 %v2215, %v2216
    %v2218 = vsel %vm427, %v2197, 0.0
    %v2219 = vadd.f32 %v2217, %v2218
    %v2220 = vsel %vm427, %v2198, 0.0
    %v2221 = vadd.f32 %v2219, %v2220
    %v2222 = vsel %vm427, %v2199, 0.0
    %v2223 = vadd.f32 %v2221, %v2222
    %v2224 = vsel %vm427, %v2200, 0.0
    %v2225 = vadd.f32 %v2223, %v2224
    %v2226 = vsel %vm427, %v2201, 0.0
    %v2227 = vadd.f32 %v2225, %v2226
    %v2228 = vsel %vm427, %v2202, 0.0
    %v2229 = vadd.f32 %v2227, %v2228
    %v2230 = vsel %vm427, %v2203, 0.0
    %v2231 = vadd.f32 %v2229, %v2230
    %v2232 = vsel %vm427, %v2204, 0.0
    %v2233 = vadd.f32 %v2231, %v2232
    %v2234 = vsel %vm427, %v2205, 0.0
    %v2235 = vadd.f32 %v2233, %v2234
    %v2236 = vsel %vm427, %v2206, 0.0
    %v2237 = vadd.f32 %v2235, %v2236
    %v2238 = vrot.slane %v2237, 4
    %v2239 = vadd.f32 %v2237, %v2238
    %v2240 = vrot.slane %v2239, 2
    %v2241 = vadd.f32 %v2239, %v2240
    %v2242 = vrot.slane %v2241, 1
    %v2243 = vadd.f32 %v2241, %v2242
    %2244 = vst.msk [vmem:[#allocation10] sm:$0x1] %vm2097, %v2243
    // Predicated region
    $region14: #{tpu_custom_call.1} parent=1 // pred_check
      _
    $region15: #{tpu_custom_call.1} parent=1 // pred_check_branch
      %2246 = sbr.rel (0) target = $region17
    $region16: #{tpu_custom_call.1} parent=1 // pred_region
      %s2248 = ssub.s32 1024, 1024
      %2249 = vsyncadd [#allocation3], %s2248
      %s2250 = sshll.u32 [#allocation2], 4
      %s2251 = int_to_ptr.vmem [resolvable:$true] %s2250
      %2256 = dma.vmem_to_hbm [thread:$0]  %s2251, 1024, %s3, [#allocation3], 64, 64, 4
    $region17: #{tpu_custom_call.1} parent=1 // pred_fallthru
      _
    // Predicated region
    $region18: #{tpu_custom_call.1} parent=1 // pred_check
      _
    $region19: #{tpu_custom_call.1} parent=1 // pred_check_branch
      %2258 = sbr.rel (0) target = $region21
    $region20: #{tpu_custom_call.1} parent=1 // pred_region
      %s2260 = ssub.s32 1024, 1024
      %2261 = vsyncadd [#allocation5], %s2260
      %s2262 = sshll.u32 [#allocation4], 4
      %s2263 = int_to_ptr.vmem [resolvable:$true] %s2262
      %2268 = dma.vmem_to_hbm [thread:$0]  %s2263, 1024, %s4, [#allocation5], 64, 64, 4
    $region21: #{tpu_custom_call.1} parent=1 // pred_fallthru
      _
    // Predicated region
    $region22: #{tpu_custom_call.1} parent=1 // pred_check
      _
    $region23: #{tpu_custom_call.1} parent=1 // pred_check_branch
      %2270 = sbr.rel (0) target = $region25
    $region24: #{tpu_custom_call.1} parent=1 // pred_region
      %s2272 = ssub.s32 16, 16
      %2273 = vsyncadd [#allocation5], %s2272
      %s2275 = sshll.u32 [#allocation6], 4
      %s2276 = int_to_ptr.vmem [resolvable:$true] %s2275
      %2278 = dma.vmem_to_hbm [thread:$0]  %s2276, 16, %s5, [#allocation5]
    $region25: #{tpu_custom_call.1} parent=1 // pred_fallthru
      _
    // Predicated region
    $region26: #{tpu_custom_call.1} parent=1 // pred_check
      _
    $region27: #{tpu_custom_call.1} parent=1 // pred_check_branch
      %2280 = sbr.rel (0) target = $region29
    $region28: #{tpu_custom_call.1} parent=1 // pred_region
      %s2282 = ssub.s32 16, 16
      %2283 = vsyncadd [#allocation8], %s2282
      %s2285 = sshll.u32 [#allocation7], 4
      %s2286 = int_to_ptr.vmem [resolvable:$true] %s2285
      %2288 = dma.vmem_to_hbm [thread:$0]  %s2286, 16, %s6, [#allocation8]
    $region29: #{tpu_custom_call.1} parent=1 // pred_fallthru
      _
    // Predicated region
    $region30: #{tpu_custom_call.1} parent=1 // pred_check
      _
    $region31: #{tpu_custom_call.1} parent=1 // pred_check_branch
      %2290 = sbr.rel (0) target = $region33
    $region32: #{tpu_custom_call.1} parent=1 // pred_region
      %s2292 = ssub.s32 16, 16
      %2293 = vsyncadd [#allocation8], %s2292
      %s2295 = sshll.u32 [#allocation9], 4
      %s2296 = int_to_ptr.vmem [resolvable:$true] %s2295
      %2298 = dma.vmem_to_hbm [thread:$0]  %s2296, 16, %s7, [#allocation8]
    $region33: #{tpu_custom_call.1} parent=1 // pred_fallthru
      _
    // Predicated region
    $region34: #{tpu_custom_call.1} parent=1 // pred_check
      _
    $region35: #{tpu_custom_call.1} parent=1 // pred_check_branch
      %2300 = sbr.rel (0) target = $region37
    $region36: #{tpu_custom_call.1} parent=1 // pred_region
      %s2302 = ssub.s32 16, 16
      %2303 = vsyncadd [#allocation11], %s2302
      %s2305 = sshll.u32 [#allocation10], 4
      %s2306 = int_to_ptr.vmem [resolvable:$true] %s2305
      %2308 = dma.vmem_to_hbm [thread:$0]  %s2306, 16, %s8, [#allocation11]
    $region37: #{tpu_custom_call.1} parent=1 // pred_fallthru
      _
    // Predicated region
    $region38: #{tpu_custom_call.1} parent=1 // pred_check
      _
    $region39: #{tpu_custom_call.1} parent=1 // pred_check_branch
      %2310 = sbr.rel (0) target = $region41
    $region40: #{tpu_custom_call.1} parent=1 // pred_region
      %2311 = dma.done [#allocation3], 1024
    $region41: #{tpu_custom_call.1} parent=1 // pred_fallthru
      _
    // Predicated region
    $region42: #{tpu_custom_call.1} parent=1 // pred_check
      _
    $region43: #{tpu_custom_call.1} parent=1 // pred_check_branch
      %2313 = sbr.rel (0) target = $region45
    $region44: #{tpu_custom_call.1} parent=1 // pred_region
      %2314 = dma.done [#allocation5], 1024
    $region45: #{tpu_custom_call.1} parent=1 // pred_fallthru
      _
    // Predicated region
    $region46: #{tpu_custom_call.1} parent=1 // pred_check
      _
    $region47: #{tpu_custom_call.1} parent=1 // pred_check_branch
      %2316 = sbr.rel (0) target = $region49
    $region48: #{tpu_custom_call.1} parent=1 // pred_region
      %2317 = dma.done [#allocation5], 16
    $region49: #{tpu_custom_call.1} parent=1 // pred_fallthru
      _
    // Predicated region
    $region50: #{tpu_custom_call.1} parent=1 // pred_check
      _
    $region51: #{tpu_custom_call.1} parent=1 // pred_check_branch
      %2319 = sbr.rel (0) target = $region53
    $region52: #{tpu_custom_call.1} parent=1 // pred_region
      %2320 = dma.done [#allocation8], 16
    $region53: #{tpu_custom_call.1} parent=1 // pred_fallthru
      _
    // Predicated region
    $region54: #{tpu_custom_call.1} parent=1 // pred_check
      _
    $region55: #{tpu_custom_call.1} parent=1 // pred_check_branch
      %2322 = sbr.rel (0) target = $region57
    $region56: #{tpu_custom_call.1} parent=1 // pred_region
      %2323 = dma.done [#allocation8], 16
    $region57: #{tpu_custom_call.1} parent=1 // pred_fallthru
      _
    // Predicated region
    $region58: #{tpu_custom_call.1} parent=1 // pred_check
      _
    $region59: #{tpu_custom_call.1} parent=1 // pred_check_branch
      %2325 = sbr.rel (0) target = $region61
    $region60: #{tpu_custom_call.1} parent=1 // pred_region
      %2326 = dma.done [#allocation11], 16
    $region61: #{tpu_custom_call.1} parent=1 // pred_fallthru
      _
    %2327 = vsyncpa [#allocation3], 1
    %2328 = vsyncpa [#allocation5], 1
    %2329 = vsyncpa [#allocation8], 1
    %2330 = vsyncpa [#allocation11], 1

</llo_original>
